<compile_context>
chip_gen: v5e
topology: v5e:2x2
jax: 0.10.0
libtpu: 0.0.40
codegen_flags: <defaults>
</compile_context>

<pallas_src>
import functools
import math

import jax
import jax.numpy as jnp
from jax import lax
from jax.experimental import pallas as pl
from jax.experimental.pallas import tpu as pltpu


def _round_up(x, m):
    return (x + m - 1) // m * m


def _choose_tiles(n_total, block_rows, block_cols):
    n128 = _round_up(n_total, 128)
    if n128 <= block_cols:
        n_pad, tn = n128, n128
        tm = min(block_rows, n_pad)
        if n_pad % tm:
            tm = 128
        # v7x megacore: prefer >= 2 row blocks so the "parallel" axis can split.
        if n_pad // tm < 2 and n_pad >= 256:
            tm //= 2
    else:
        tm, tn = block_rows, block_cols
        n_pad = _round_up(n_total, tm * tn // math.gcd(tm, tn))
    return tm, tn, n_pad


def _supcon_kernel(feat_r_ref, feat_c_ref, lab_r_ref, lab_c_ref, aux_ref,
                   out_ref, m_ref, l_ref, s_ref, *,
                   tm, tn, has_pad, contrast_resident, loss_scale):
    i = pl.program_id(0)          # row (anchor) block   -- "parallel"
    j = pl.program_id(1)          # column (contrast) block -- "arbitrary" reduction
    n_col_blocks = pl.num_programs(1)

    @pl.when(j == 0)
    def _init():
        # Accumulators and the -1e30 sentinel MUST stay f32 (online LSE breaks in bf16).
        m_ref[...] = jnp.full((tm, 1), -1e30, dtype=jnp.float32)
        l_ref[...] = jnp.zeros((tm, 1), dtype=jnp.float32)
        s_ref[...] = jnp.zeros((tm, 1), dtype=jnp.float32)

    # Features are already scaled by 1/sqrt(T) on the host and live in the compute
    # dtype (bf16 or f32) -> no per-tile scale/cast, pure bf16 (or f32) MXU operands.
    feat_r = feat_r_ref[...]                                   # (tm, d_pad)
    if contrast_resident:
        col_start = pl.multiple_of(j * tn, tn)
        feat_c = feat_c_ref[pl.ds(col_start, tn), :]           # slice of resident block
    else:
        feat_c = feat_c_ref[...]                               # (tn, d_pad)

    # sims[r, c] = <f_r, f_c> / T ;  (1,1)-contraction (trans_b on the MXU), f32 acc.
    # TODO(synk): verify via pl.lower_as_mlir that no explicit vxpose of feat_c is
    # emitted; if it were, pass a host-pre-transposed (d_pad, n_pad) contrast copy.
    sims = lax.dot_general(feat_r, feat_c,
                           dimension_numbers=(((1,), (1,)), ((), ())),
                           preferred_element_type=jnp.float32)  # (tm, tn) f32

    lab_r = lab_r_ref[...]                                      # (tm, 1) int32
    lab_c = lab_c_ref[...]                                      # (1, tn) int32

    # Positive-pair numerator: label match. Self is included here and subtracted once
    # in the finalize (exact host-computed self-sim); padded columns never match
    # because their label is -1.
    pos = lab_r == lab_c
    s_ref[...] += jnp.sum(jnp.where(pos, sims, 0.0), axis=1, keepdims=True)

    def lse_update(sims_d):
        m_old = m_ref[...]
        m_new = jnp.maximum(m_old, jnp.max(sims_d, axis=1, keepdims=True))
        alpha = jnp.exp(m_old - m_new)
        l_ref[...] = alpha * l_ref[...] + jnp.sum(jnp.exp(sims_d - m_new),
                                                  axis=1, keepdims=True)
        m_ref[...] = m_new

    # Only tiles overlapping the diagonal (self-pairs) or the padded tail need masks.
    row0 = i * tm
    col0 = j * tn
    on_diag = jnp.logical_and(row0 < col0 + tn, col0 < row0 + tm)
    if has_pad:
        needs_mask = jnp.logical_or(on_diag, j == n_col_blocks - 1)
    else:
        needs_mask = on_diag

    @pl.when(needs_mask)
    def _masked():
        rows = row0 + lax.broadcasted_iota(jnp.int32, (tm, tn), 0)
        cols = col0 + lax.broadcasted_iota(jnp.int32, (tm, tn), 1)
        keep = rows != cols
        if has_pad:
            keep = jnp.logical_and(keep, lab_c >= 0)
        lse_update(jnp.where(keep, sims, jnp.float32(-1e30)))

    @pl.when(jnp.logical_not(needs_mask))
    def _unmasked():
        lse_update(sims)          # common case: zero mask-construction work

    @pl.when(j == n_col_blocks - 1)
    def _finalize():
        cnt = aux_ref[:, 0:1]         # host-precomputed positive count per anchor
        self_sim = aux_ref[:, 1:2]    # <f_i, f_i>/T
        s_pos = s_ref[...] - self_sim
        log_denom = m_ref[...] + jnp.log(l_ref[...])
        mean_log_prob_pos = (s_pos - cnt * log_denom) / jnp.maximum(cnt, 1.0)
        loss = -jnp.float32(loss_scale) * mean_log_prob_pos
        # Rows with no positives (incl. padded rows) contribute 0 (NaN guard).
        out_ref[...] = jnp.where(cnt > 0.0, loss, 0.0)


def text_supcon_loss(features,
                     labels=None,
                     mask=None,
                     *,
                     temperature=0.07,
                     contrast_mode="all",
                     base_temperature=0.07,
                     block_rows=256,
                     block_cols=1024,
                     use_bf16_matmul=False):
    """JAX/Pallas port of TextSupConLoss.forward (contrast_mode='all')."""
    if features.ndim < 3:
        raise ValueError("features need at least 3 dims [bsz, n_views, ...]")
    if features.ndim > 3:
        features = features.reshape(features.shape[0], features.shape[1], -1)
    bsz, n_views, dim = features.shape

    if labels is not None and mask is not None:
        raise ValueError("cannot define both labels and mask")
    if mask is not None:
        # TODO(synk): arbitrary (bsz,bsz) mask is not label-expressible in-kernel.
        raise NotImplementedError("explicit mask is not supported; pass labels")
    if contrast_mode != "all":
        # TODO(synk): contrast_mode='one' (anchor = first view only) not implemented.
        raise NotImplementedError("only contrast_mode='all' is implemented")

    if labels is None:
        labels = jnp.arange(bsz, dtype=jnp.int32)   # eye mask == unique label / sample
    labels = jnp.asarray(labels).reshape(-1).astype(jnp.int32)
    if labels.shape[0] != bsz:
        raise ValueError("number of labels does not match features")

    n_total = bsz * n_views
    # Batch-major flatten (free reshape); the loss is invariant to a consistent anchor
    # permutation, so this matches PyTorch's view-major torch.cat(torch.unbind(...)).
    feat = features.reshape(n_total, dim).astype(jnp.float32)
    # Fold 1/temperature symmetrically (1/sqrt(T) on each operand) so one array serves
    # as both matmul operands and both stay in the compute dtype inside the kernel.
    feat_scaled = feat * jnp.float32(1.0 / math.sqrt(float(temperature)))
    anchor_labels = jnp.repeat(labels, n_views)                       # (N,)

    # Host-precomputed per-anchor positive count: n_views * (#samples w/ label) - 1.
    same = (labels[:, None] == labels[None, :]).astype(jnp.float32)   # (bsz,bsz), tiny
    cnt = jnp.repeat(float(n_views) * jnp.sum(same, axis=1) - 1.0, n_views)

    feat_dtype = jnp.bfloat16 if use_bf16_matmul else jnp.float32
    feat_q = feat_scaled.astype(feat_dtype)
    fq32 = feat_q.astype(jnp.float32)
    self_sim = jnp.sum(fq32 * fq32, axis=1)                           # <f_i,f_i>/T
    aux = jnp.stack([cnt, self_sim], axis=1)                          # (N, 2) f32

    # Padding: feature dim to 128 lanes, anchor count to the tile sizes.
    d_pad = _round_up(dim, 128)
    tm, tn, n_pad = _choose_tiles(n_total, block_rows, block_cols)
    has_pad = n_pad > n_total

    feat_p = jnp.pad(feat_q, ((0, n_pad - n_total), (0, d_pad - dim)))
    lab_p = jnp.pad(anchor_labels, (0, n_pad - n_total), constant_values=-1)
    aux_p = jnp.pad(aux, ((0, n_pad - n_total), (0, 0)))
    lab_row = lab_p.reshape(n_pad, 1)
    lab_col = lab_p.reshape(1, n_pad)

    # Resident contrast block when the whole padded feature matrix fits comfortably
    # in VMEM (conservative gate so it also holds on v7x: 64 MiB physical VMEM).
    itemsize = jnp.dtype(feat_dtype).itemsize
    contrast_resident = (n_pad * d_pad * itemsize) <= (10 << 20)
    if contrast_resident:
        contrast_spec = pl.BlockSpec((n_pad, d_pad), lambda i, j: (0, 0))
    else:
        contrast_spec = pl.BlockSpec((tn, d_pad), lambda i, j: (j, 0))

    grid = (n_pad // tm, n_pad // tn)
    kernel = functools.partial(
        _supcon_kernel,
        tm=tm, tn=tn, has_pad=has_pad, contrast_resident=contrast_resident,
        loss_scale=float(temperature) / float(base_temperature))

    per_anchor = pl.pallas_call(
        kernel,
        out_shape=jax.ShapeDtypeStruct((n_pad, 1), jnp.float32),
        grid_spec=pltpu.PrefetchScalarGridSpec(
            num_scalar_prefetch=0,
            grid=grid,
            in_specs=[
                pl.BlockSpec((tm, d_pad), lambda i, j: (i, 0)),   # anchor row tile
                contrast_spec,                                    # contrast operand
                pl.BlockSpec((tm, 1), lambda i, j: (i, 0)),       # row labels
                pl.BlockSpec((1, tn), lambda i, j: (0, j)),       # col labels
                pl.BlockSpec((tm, 2), lambda i, j: (i, 0)),       # [pos count, self sim]
            ],
            out_specs=pl.BlockSpec((tm, 1), lambda i, j: (i, 0)),
            scratch_shapes=[pltpu.VMEM((tm, 1), jnp.float32)] * 3,  # m, l, s_pos
        ),
        compiler_params=pltpu.CompilerParams(
            dimension_semantics=("parallel", "arbitrary"),
            vmem_limit_bytes=32 * 1024 * 1024),                     # v7x-safe
    )(feat_p, feat_p, lab_row, lab_col, aux_p)

    # loss.view(anchor_count, batch_size).mean() == mean over all N real anchors.
    return jnp.sum(per_anchor) / jnp.float32(n_total)


def _reference_loss(features, labels=None, temperature=0.07, base_temperature=0.07):
    """Pure-JAX reference mirroring the PyTorch forward exactly (view-major)."""
    bsz, n_views, dim = features.shape
    n = n_views * bsz
    cf = jnp.transpose(features, (1, 0, 2)).reshape(n, dim).astype(jnp.float32)
    if labels is None:
        base_mask = jnp.eye(bsz, dtype=jnp.float32)
    else:
        lab = labels.reshape(-1, 1)
        base_mask = (lab == lab.T).astype(jnp.float32)
    full_mask = jnp.tile(base_mask, (n_views, n_views))
    sims = jnp.matmul(cf, cf.T, precision=lax.Precision.HIGHEST) / temperature
    logits = sims - jnp.max(sims, axis=1, keepdims=True)
    logits_mask = 1.0 - jnp.eye(n, dtype=jnp.float32)
    full_mask = full_mask * logits_mask
    exp_logits = jnp.exp(logits) * logits_mask
    log_prob = logits - jnp.log(exp_logits.sum(1, keepdims=True))
    mean_log_prob_pos = (full_mask * log_prob).sum(1) / full_mask.sum(1)
    return (-(temperature / base_temperature) * mean_log_prob_pos).mean()


if __name__ == "__main__":
    key = jax.random.PRNGKey(0)
    k_feat, k_lab = jax.random.split(key)

    bsz, n_views, dim = 8, 2, 32
    feats = jax.random.normal(k_feat, (bsz, n_views, dim), dtype=jnp.float32)
    feats = feats / jnp.linalg.norm(feats, axis=-1, keepdims=True)  # typical SupCon usage
    labels = jax.random.randint(k_lab, (bsz,), 0, 4, dtype=jnp.int32)

    # supervised path (labels -> in-kernel label-equality mask)
    loss = jax.block_until_ready(text_supcon_loss(feats, labels=labels))
    ref = jax.block_until_ready(_reference_loss(feats, labels))
    assert jnp.allclose(loss, ref, rtol=1e-3, atol=1e-3), (loss, ref)

    # unsupervised path (no labels -> eye mask: positives are the other views only)
    loss_u = jax.block_until_ready(text_supcon_loss(feats))
    ref_u = jax.block_until_ready(_reference_loss(feats, None))
    assert jnp.allclose(loss_u, ref_u, rtol=1e-3, atol=1e-3), (loss_u, ref_u)

    # bf16 MXU fast path (both operands bf16, f32 accumulation) - looser tolerance
    loss_b = jax.block_until_ready(
        text_supcon_loss(feats, labels=labels, use_bf16_matmul=True))
    assert jnp.allclose(loss_b, ref, rtol=5e-2, atol=5e-2), (loss_b, ref)

    print("KERNEL_OK")
</pallas_src>

<mosaic_0001>
module attributes {stable_mosaic.version = 11 : i64} {
  func.func @_supcon_kernel(%arg0: i32, %arg1: i32, %arg2: memref<128x128xf32, #tpu.memory_space<vmem>>, %arg3: memref<128x128xf32, #tpu.memory_space<vmem>>, %arg4: memref<128x1xi32, #tpu.memory_space<vmem>>, %arg5: memref<1x128xi32, #tpu.memory_space<vmem>>, %arg6: memref<128x2xf32, #tpu.memory_space<vmem>>, %arg7: memref<128x1xf32, #tpu.memory_space<vmem>>, %arg8: memref<128x1xf32, #tpu.memory_space<vmem>>, %arg9: memref<128x1xf32, #tpu.memory_space<vmem>>, %arg10: memref<128x1xf32, #tpu.memory_space<vmem>>) attributes {dimension_semantics = [#tpu.dimension_semantics<parallel>, #tpu.dimension_semantics<arbitrary>], iteration_bounds = array<i64: 1, 1>, scalar_prefetch = 0 : i64, scratch_operands = 3 : i64, tpu.core_type = #tpu.core_type<tc>, window_params = [{transform_indices = @transform_0, window_bounds = array<i64: 128, 128>}, {pipeline_mode = #tpu.pipeline_mode<synchronous>, transform_indices = @transform_1, window_bounds = array<i64: 128, 128>}, {transform_indices = @transform_2, window_bounds = array<i64: 128, 1>}, {transform_indices = @transform_3, window_bounds = array<i64: 1, 128>}, {transform_indices = @transform_4, window_bounds = array<i64: 128, 2>}, {transform_indices = @transform_5, window_bounds = array<i64: 128, 1>}]} {
    %c0_i32 = arith.constant 0 : i32
    %0 = arith.cmpi eq, %arg1, %c0_i32 : i32
    %1 = arith.extui %0 : i1 to i32
    %c0_i32_0 = arith.constant 0 : i32
    %2 = arith.cmpi ne, %1, %c0_i32_0 : i32
    scf.if %2 {
      %cst_22 = arith.constant -1.000000e+30 : f32
      %38 = vector.broadcast %cst_22 : f32 to vector<128x1xf32>
      %c0_23 = arith.constant 0 : index
      %c0_24 = arith.constant 0 : index
      %39 = vector.load %arg8[%c0_23, %c0_24] : memref<128x1xf32, #tpu.memory_space<vmem>>, vector<128x1xf32>
      tpu.vector_store %arg8[%c0_23, %c0_24], %38 {strides = array<i32>} : memref<128x1xf32, #tpu.memory_space<vmem>>, vector<128x1xf32>,
      %cst_25 = arith.constant 0.000000e+00 : f32
      %40 = vector.broadcast %cst_25 : f32 to vector<128x1xf32>
      %c0_26 = arith.constant 0 : index
      %c0_27 = arith.constant 0 : index
      %41 = vector.load %arg9[%c0_26, %c0_27] : memref<128x1xf32, #tpu.memory_space<vmem>>, vector<128x1xf32>
      tpu.vector_store %arg9[%c0_26, %c0_27], %40 {strides = array<i32>} : memref<128x1xf32, #tpu.memory_space<vmem>>, vector<128x1xf32>,
      %cst_28 = arith.constant 0.000000e+00 : f32
      %42 = vector.broadcast %cst_28 : f32 to vector<128x1xf32>
      %c0_29 = arith.constant 0 : index
      %c0_30 = arith.constant 0 : index
      %43 = vector.load %arg10[%c0_29, %c0_30] : memref<128x1xf32, #tpu.memory_space<vmem>>, vector<128x1xf32>
      tpu.vector_store %arg10[%c0_29, %c0_30], %42 {strides = array<i32>} : memref<128x1xf32, #tpu.memory_space<vmem>>, vector<128x1xf32>,
    } else {
    }
    %c0 = arith.constant 0 : index
    %c0_1 = arith.constant 0 : index
    %3 = vector.load %arg2[%c0, %c0_1] : memref<128x128xf32, #tpu.memory_space<vmem>>, vector<128x128xf32>
    %c128_i32 = arith.constant 128 : i32
    %4 = arith.muli %arg1, %c128_i32 : i32
    %5 = tpu.assume_multiple %4, 128 : i32
    %6 = arith.index_cast %5 : i32 to index
    %c0_2 = arith.constant 0 : index
    %7 = vector.load %arg3[%6, %c0_2] : memref<128x128xf32, #tpu.memory_space<vmem>>, vector<128x128xf32>
    %cst = arith.constant dense<0.000000e+00> : vector<128x128xf32>
    %8 = tpu.matmul %3, %7, %cst {dimension_numbers = #tpu.dot_dimension_numbers<[1], [1], [0], [0], [0, 0, 1, 0], [], []>} : vector<128x128xf32>, vector<128x128xf32>, vector<128x128xf32> -> vector<128x128xf32>
    %c0_3 = arith.constant 0 : index
    %c0_4 = arith.constant 0 : index
    %9 = vector.load %arg4[%c0_3, %c0_4] : memref<128x1xi32, #tpu.memory_space<vmem>>, vector<128x1xi32>
    %c0_5 = arith.constant 0 : index
    %c0_6 = arith.constant 0 : index
    %10 = vector.load %arg5[%c0_5, %c0_6] : memref<1x128xi32, #tpu.memory_space<vmem>>, vector<1x128xi32>
    %11 = vector.broadcast %9 : vector<128x1xi32> to vector<128x128xi32>
    %12 = vector.broadcast %10 : vector<1x128xi32> to vector<128x128xi32>
    %13 = arith.cmpi eq, %11, %12 : vector<128x128xi32>
    %c0_7 = arith.constant 0 : index
    %c0_8 = arith.constant 0 : index
    %14 = vector.load %arg10[%c0_7, %c0_8] : memref<128x1xf32, #tpu.memory_space<vmem>>, vector<128x1xf32>
    %cst_9 = arith.constant 0.000000e+00 : f32
    %15 = vector.broadcast %cst_9 : f32 to vector<128x128xf32>
    %16 = arith.select %13, %8, %15 : vector<128x128xi1>, vector<128x128xf32>
    %cst_10 = arith.constant dense<0.000000e+00> : vector<128xf32>
    %17 = vector.multi_reduction <add>, %16, %cst_10 [1] : vector<128x128xf32> to vector<128xf32>
    %18 = vector.shape_cast %17 : vector<128xf32> to vector<128x1xf32>
    %19 = arith.addf %14, %18 : vector<128x1xf32>
    %c0_11 = arith.constant 0 : index
    %c0_12 = arith.constant 0 : index
    %20 = vector.load %arg10[%c0_11, %c0_12] : memref<128x1xf32, #tpu.memory_space<vmem>>, vector<128x1xf32>
    tpu.vector_store %arg10[%c0_11, %c0_12], %19 {strides = array<i32>} : memref<128x1xf32, #tpu.memory_space<vmem>>, vector<128x1xf32>,
    %c128_i32_13 = arith.constant 128 : i32
    %21 = arith.muli %arg0, %c128_i32_13 : i32
    %c128_i32_14 = arith.constant 128 : i32
    %22 = arith.muli %arg1, %c128_i32_14 : i32
    %c128_i32_15 = arith.constant 128 : i32
    %23 = arith.addi %22, %c128_i32_15 : i32
    %24 = arith.cmpi slt, %21, %23 : i32
    %c128_i32_16 = arith.constant 128 : i32
    %25 = arith.addi %21, %c128_i32_16 : i32
    %26 = arith.cmpi slt, %22, %25 : i32
    %27 = arith.andi %24, %26 : i1
    %c0_i32_17 = arith.constant 0 : i32
    %28 = arith.cmpi eq, %arg1, %c0_i32_17 : i32
    %29 = arith.ori %27, %28 : i1
    %30 = arith.extui %29 : i1 to i32
    %c0_i32_18 = arith.constant 0 : i32
    %31 = arith.cmpi ne, %30, %c0_i32_18 : i32
    scf.if %31 {
      %38 = tpu.iota {dimensions = array<i32: 0>} : vector<128x128xi32>
      %39 = vector.broadcast %21 : i32 to vector<128x128xi32>
      %40 = arith.addi %39, %38 : vector<128x128xi32>
      %41 = tpu.iota {dimensions = array<i32: 1>} : vector<128x128xi32>
      %42 = vector.broadcast %22 : i32 to vector<128x128xi32>
      %43 = arith.addi %42, %41 : vector<128x128xi32>
      %44 = arith.cmpi ne, %40, %43 : vector<128x128xi32>
      %c0_i32_22 = arith.constant 0 : i32
      %45 = vector.broadcast %c0_i32_22 : i32 to vector<1x128xi32>
      %46 = arith.cmpi sge, %10, %45 : vector<1x128xi32>
      %47 = vector.broadcast %46 : vector<1x128xi1> to vector<128x128xi1>
      %48 = arith.andi %44, %47 : vector<128x128xi1>
      %cst_23 = arith.constant -1.000000e+30 : f32
      %49 = vector.broadcast %cst_23 : f32 to vector<128x128xf32>
      %50 = arith.select %48, %8, %49 : vector<128x128xi1>, vector<128x128xf32>
      %c0_24 = arith.constant 0 : index
      %c0_25 = arith.constant 0 : index
      %51 = vector.load %arg8[%c0_24, %c0_25] : memref<128x1xf32, #tpu.memory_space<vmem>>, vector<128x1xf32>
      %cst_26 = arith.constant dense<0xFF800000> : vector<128xf32>
      %52 = vector.multi_reduction <maximumf>, %50, %cst_26 [1] : vector<128x128xf32> to vector<128xf32>
      %53 = vector.shape_cast %52 : vector<128xf32> to vector<128x1xf32>
      %54 = arith.maximumf %51, %53 : vector<128x1xf32>
      %55 = arith.subf %51, %54 : vector<128x1xf32>
      %56 = math.exp %55 : vector<128x1xf32>
      %c0_27 = arith.constant 0 : index
      %c0_28 = arith.constant 0 : index
      %57 = vector.load %arg9[%c0_27, %c0_28] : memref<128x1xf32, #tpu.memory_space<vmem>>, vector<128x1xf32>
      %58 = arith.mulf %56, %57 : vector<128x1xf32>
      %59 = vector.broadcast %54 : vector<128x1xf32> to vector<128x128xf32>
      %60 = arith.subf %50, %59 : vector<128x128xf32>
      %61 = math.exp %60 : vector<128x128xf32>
      %cst_29 = arith.constant dense<0.000000e+00> : vector<128xf32>
      %62 = vector.multi_reduction <add>, %61, %cst_29 [1] : vector<128x128xf32> to vector<128xf32>
      %63 = vector.shape_cast %62 : vector<128xf32> to vector<128x1xf32>
      %64 = arith.addf %58, %63 : vector<128x1xf32>
      %c0_30 = arith.constant 0 : index
      %c0_31 = arith.constant 0 : index
      %65 = vector.load %arg9[%c0_30, %c0_31] : memref<128x1xf32, #tpu.memory_space<vmem>>, vector<128x1xf32>
      tpu.vector_store %arg9[%c0_30, %c0_31], %64 {strides = array<i32>} : memref<128x1xf32, #tpu.memory_space<vmem>>, vector<128x1xf32>,
      %c0_32 = arith.constant 0 : index
      %c0_33 = arith.constant 0 : index
      %66 = vector.load %arg8[%c0_32, %c0_33] : memref<128x1xf32, #tpu.memory_space<vmem>>, vector<128x1xf32>
      tpu.vector_store %arg8[%c0_32, %c0_33], %54 {strides = array<i32>} : memref<128x1xf32, #tpu.memory_space<vmem>>, vector<128x1xf32>,
    } else {
    }
    %true = arith.constant true
    %32 = arith.xori %29, %true : i1
    %33 = arith.extui %32 : i1 to i32
    %c0_i32_19 = arith.constant 0 : i32
    %34 = arith.cmpi ne, %33, %c0_i32_19 : i32
    scf.if %34 {
      %c0_22 = arith.constant 0 : index
      %c0_23 = arith.constant 0 : index
      %38 = vector.load %arg8[%c0_22, %c0_23] : memref<128x1xf32, #tpu.memory_space<vmem>>, vector<128x1xf32>
      %cst_24 = arith.constant dense<0xFF800000> : vector<128xf32>
      %39 = vector.multi_reduction <maximumf>, %8, %cst_24 [1] : vector<128x128xf32> to vector<128xf32>
      %40 = vector.shape_cast %39 : vector<128xf32> to vector<128x1xf32>
      %41 = arith.maximumf %38, %40 : vector<128x1xf32>
      %42 = arith.subf %38, %41 : vector<128x1xf32>
      %43 = math.exp %42 : vector<128x1xf32>
      %c0_25 = arith.constant 0 : index
      %c0_26 = arith.constant 0 : index
      %44 = vector.load %arg9[%c0_25, %c0_26] : memref<128x1xf32, #tpu.memory_space<vmem>>, vector<128x1xf32>
      %45 = arith.mulf %43, %44 : vector<128x1xf32>
      %46 = vector.broadcast %41 : vector<128x1xf32> to vector<128x128xf32>
      %47 = arith.subf %8, %46 : vector<128x128xf32>
      %48 = math.exp %47 : vector<128x128xf32>
      %cst_27 = arith.constant dense<0.000000e+00> : vector<128xf32>
      %49 = vector.multi_reduction <add>, %48, %cst_27 [1] : vector<128x128xf32> to vector<128xf32>
      %50 = vector.shape_cast %49 : vector<128xf32> to vector<128x1xf32>
      %51 = arith.addf %45, %50 : vector<128x1xf32>
      %c0_28 = arith.constant 0 : index
      %c0_29 = arith.constant 0 : index
      %52 = vector.load %arg9[%c0_28, %c0_29] : memref<128x1xf32, #tpu.memory_space<vmem>>, vector<128x1xf32>
      tpu.vector_store %arg9[%c0_28, %c0_29], %51 {strides = array<i32>} : memref<128x1xf32, #tpu.memory_space<vmem>>, vector<128x1xf32>,
      %c0_30 = arith.constant 0 : index
      %c0_31 = arith.constant 0 : index
      %53 = vector.load %arg8[%c0_30, %c0_31] : memref<128x1xf32, #tpu.memory_space<vmem>>, vector<128x1xf32>
      tpu.vector_store %arg8[%c0_30, %c0_31], %41 {strides = array<i32>} : memref<128x1xf32, #tpu.memory_space<vmem>>, vector<128x1xf32>,
    } else {
    }
    %c0_i32_20 = arith.constant 0 : i32
    %35 = arith.cmpi eq, %arg1, %c0_i32_20 : i32
    %36 = arith.extui %35 : i1 to i32
    %c0_i32_21 = arith.constant 0 : i32
    %37 = arith.cmpi ne, %36, %c0_i32_21 : i32
    scf.if %37 {
      %c0_22 = arith.constant 0 : index
      %c0_23 = arith.constant 0 : index
      %38 = vector.load %arg6[%c0_22, %c0_23] : memref<128x2xf32, #tpu.memory_space<vmem>>, vector<128x1xf32>
      %c0_24 = arith.constant 0 : index
      %c1 = arith.constant 1 : index
      %39 = vector.load %arg6[%c0_24, %c1] : memref<128x2xf32, #tpu.memory_space<vmem>>, vector<128x1xf32>
      %c0_25 = arith.constant 0 : index
      %c0_26 = arith.constant 0 : index
      %40 = vector.load %arg10[%c0_25, %c0_26] : memref<128x1xf32, #tpu.memory_space<vmem>>, vector<128x1xf32>
      %41 = arith.subf %40, %39 : vector<128x1xf32>
      %c0_27 = arith.constant 0 : index
      %c0_28 = arith.constant 0 : index
      %42 = vector.load %arg8[%c0_27, %c0_28] : memref<128x1xf32, #tpu.memory_space<vmem>>, vector<128x1xf32>
      %c0_29 = arith.constant 0 : index
      %c0_30 = arith.constant 0 : index
      %43 = vector.load %arg9[%c0_29, %c0_30] : memref<128x1xf32, #tpu.memory_space<vmem>>, vector<128x1xf32>
      %44 = math.log %43 : vector<128x1xf32>
      %45 = arith.addf %42, %44 : vector<128x1xf32>
      %46 = arith.mulf %38, %45 : vector<128x1xf32>
      %47 = arith.subf %41, %46 : vector<128x1xf32>
      %cst_31 = arith.constant 1.000000e+00 : f32
      %48 = vector.broadcast %cst_31 : f32 to vector<128x1xf32>
      %49 = arith.maximumf %38, %48 : vector<128x1xf32>
      %50 = arith.divf %47, %49 : vector<128x1xf32>
      %cst_32 = arith.constant 0.000000e+00 : f32
      %cst_33 = arith.constant 1.000000e+00 : f32
      %51 = arith.subf %cst_32, %cst_33 : f32
      %52 = vector.broadcast %51 : f32 to vector<128x1xf32>
      %53 = arith.mulf %52, %50 : vector<128x1xf32>
      %cst_34 = arith.constant 0.000000e+00 : f32
      %54 = vector.broadcast %cst_34 : f32 to vector<128x1xf32>
      %55 = arith.cmpf ogt, %38, %54 : vector<128x1xf32>
      %cst_35 = arith.constant 0.000000e+00 : f32
      %56 = vector.broadcast %cst_35 : f32 to vector<128x1xf32>
      %57 = arith.select %55, %53, %56 : vector<128x1xi1>, vector<128x1xf32>
      %c0_36 = arith.constant 0 : index
      %c0_37 = arith.constant 0 : index
      %58 = vector.load %arg7[%c0_36, %c0_37] : memref<128x1xf32, #tpu.memory_space<vmem>>, vector<128x1xf32>
      tpu.vector_store %arg7[%c0_36, %c0_37], %57 {strides = array<i32>} : memref<128x1xf32, #tpu.memory_space<vmem>>, vector<128x1xf32>,
    } else {
    }
    return
  }
  func.func @transform_0(%arg0: i32, %arg1: i32) -> (i32, i32) {
    %c0_i32 = arith.constant 0 : i32
    %c0_i32_0 = arith.constant 0 : i32
    return %arg0, %c0_i32 : i32, i32
  }
  func.func @transform_1(%arg0: i32, %arg1: i32) -> (i32, i32) {
    %c0_i32 = arith.constant 0 : i32
    %c0_i32_0 = arith.constant 0 : i32
    %c0_i32_1 = arith.constant 0 : i32
    return %c0_i32, %c0_i32_0 : i32, i32
  }
  func.func @transform_2(%arg0: i32, %arg1: i32) -> (i32, i32) {
    %c0_i32 = arith.constant 0 : i32
    %c0_i32_0 = arith.constant 0 : i32
    return %arg0, %c0_i32 : i32, i32
  }
  func.func @transform_3(%arg0: i32, %arg1: i32) -> (i32, i32) {
    %c0_i32 = arith.constant 0 : i32
    %c0_i32_0 = arith.constant 0 : i32
    return %c0_i32, %arg1 : i32, i32
  }
  func.func @transform_4(%arg0: i32, %arg1: i32) -> (i32, i32) {
    %c0_i32 = arith.constant 0 : i32
    %c0_i32_0 = arith.constant 0 : i32
    return %arg0, %c0_i32 : i32, i32
  }
  func.func @transform_5(%arg0: i32, %arg1: i32) -> (i32, i32) {
    %c0_i32 = arith.constant 0 : i32
    %c0_i32_0 = arith.constant 0 : i32
    return %arg0, %c0_i32 : i32, i32
  }
}

</mosaic_0001>

<llo_original>
// kernel: tpu_custom_call.1
$region0: #{tpu_custom_call.1}
  #allocation0 [shape = 'u32[]', space=smem, size = 0x4, offset = 0x4, fixed_abs, tag = 'smem constant byte address 0x4 - core index']
  #allocation1 [shape = 'u32[72,128]{1,0:T(1,128)}', space=vmem, size = 0x9000, scoped, tag = 'internal scratch']
  #allocation2 [shape = 'f32[128,1]{1,0:T(8,128)}', space=vmem, size = 0x10000, scoped, tag = 'scratch operand']
  #allocation3 [shape = 'f32[128,1]{1,0:T(8,128)}', space=vmem, size = 0x10000, scoped, tag = 'scratch operand']
  #allocation4 [shape = 'f32[128,1]{1,0:T(8,128)}', space=vmem, size = 0x10000, scoped, tag = 'scratch operand']
  %s0 = inlined_call_operand.vmem [shape: f32[128,128], index: 0, kind: input, shape index: {}]
  %s1 = inlined_call_operand.vmem [shape: f32[128,128], index: 1, kind: input, shape index: {}]
  %s2 = inlined_call_operand.vmem [shape: s32[128,1], index: 2, kind: input, shape index: {}]
  %s3 = inlined_call_operand.vmem [shape: s32[1,128], index: 3, kind: input, shape index: {}]
  %s4 = inlined_call_operand.vmem [shape: f32[128,2], index: 4, kind: input, shape index: {}]
  %s5 = inlined_call_operand.vmem [shape: f32[128,1], index: 5, kind: output, shape index: {}]
  %s6 = sld [smem:[#allocation0]]
  $region46: #{tpu_custom_call.1} parent=0
    _
  %s8 = ssub.s32 1, %s6
  %s9 = scalar_select 0, %s8, %s6
  // Predicated region
  $region2: #{tpu_custom_call.1} parent=0 // pred_check
    _
  $region3: #{tpu_custom_call.1} parent=0 // pred_check_branch
    %11 = sbr.rel (0) target = $region5
  $region4: #{tpu_custom_call.1} parent=0 // pred_region
    _
  $region5: #{tpu_custom_call.1} parent=0 // pred_fallthru
    _
  // Predicated region
  $region6: #{tpu_custom_call.1} parent=0 // pred_check
    _
  $region7: #{tpu_custom_call.1} parent=0 // pred_check_branch
    %13 = sbr.rel (0) target = $region9
  $region8: #{tpu_custom_call.1} parent=0 // pred_region
    _
  $region9: #{tpu_custom_call.1} parent=0 // pred_fallthru
    _
  // Predicated region
  $region10: #{tpu_custom_call.1} parent=0 // pred_check
    _
  $region11: #{tpu_custom_call.1} parent=0 // pred_check_branch
    %15 = sbr.rel (0) target = $region13
  $region12: #{tpu_custom_call.1} parent=0 // pred_region
    _
  $region13: #{tpu_custom_call.1} parent=0 // pred_fallthru
    _
  // Predicated region
  $region14: #{tpu_custom_call.1} parent=0 // pred_check
    _
  $region15: #{tpu_custom_call.1} parent=0 // pred_check_branch
    %17 = sbr.rel (0) target = $region17
  $region16: #{tpu_custom_call.1} parent=0 // pred_region
    _
  $region17: #{tpu_custom_call.1} parent=0 // pred_fallthru
    _
  // Predicated region
  $region18: #{tpu_custom_call.1} parent=0 // pred_check
    _
  $region19: #{tpu_custom_call.1} parent=0 // pred_check_branch
    %19 = sbr.rel (0) target = $region21
  $region20: #{tpu_custom_call.1} parent=0 // pred_region
    _
  $region21: #{tpu_custom_call.1} parent=0 // pred_fallthru
    _
  %p20 = scmp.eq.s32.totalorder 0, 0
  // Predicated region
  $region22: #{tpu_custom_call.1} parent=0 // pred_check
    %p21 = pneg %p20
  $region23: #{tpu_custom_call.1} parent=0 // pred_check_branch
    %23 = sbr.rel (%p21) target = $region25
  $region24: #{tpu_custom_call.1} parent=0 // pred_region
    %vm24 = vcmask 7168
    %25 = vst.msk [vmem:[#allocation2] sm:$0xff] %vm24, -1e+30
    %26 = vst.msk [vmem:[#allocation2 + $0x8] sm:$0xff] %vm24, -1e+30
    %27 = vst.msk [vmem:[#allocation2 + $0x10] sm:$0xff] %vm24, -1e+30
    %28 = vst.msk [vmem:[#allocation2 + $0x18] sm:$0xff] %vm24, -1e+30
    %29 = vst.msk [vmem:[#allocation2 + $0x20] sm:$0xff] %vm24, -1e+30
    %30 = vst.msk [vmem:[#allocation2 + $0x28] sm:$0xff] %vm24, -1e+30
    %31 = vst.msk [vmem:[#allocation2 + $0x30] sm:$0xff] %vm24, -1e+30
    %32 = vst.msk [vmem:[#allocation2 + $0x38] sm:$0xff] %vm24, -1e+30
    %33 = vst.msk [vmem:[#allocation2 + $0x40] sm:$0xff] %vm24, -1e+30
    %34 = vst.msk [vmem:[#allocation2 + $0x48] sm:$0xff] %vm24, -1e+30
    %35 = vst.msk [vmem:[#allocation2 + $0x50] sm:$0xff] %vm24, -1e+30
    %36 = vst.msk [vmem:[#allocation2 + $0x58] sm:$0xff] %vm24, -1e+30
    %37 = vst.msk [vmem:[#allocation2 + $0x60] sm:$0xff] %vm24, -1e+30
    %38 = vst.msk [vmem:[#allocation2 + $0x68] sm:$0xff] %vm24, -1e+30
    %39 = vst.msk [vmem:[#allocation2 + $0x70] sm:$0xff] %vm24, -1e+30
    %40 = vst.msk [vmem:[#allocation2 + $0x78] sm:$0xff] %vm24, -1e+30
    %41 = vst.msk [vmem:[#allocation3] sm:$0xff] %vm24, 0.0
    %42 = vst.msk [vmem:[#allocation3 + $0x8] sm:$0xff] %vm24, 0.0
    %43 = vst.msk [vmem:[#allocation3 + $0x10] sm:$0xff] %vm24, 0.0
    %44 = vst.msk [vmem:[#allocation3 + $0x18] sm:$0xff] %vm24, 0.0
    %45 = vst.msk [vmem:[#allocation3 + $0x20] sm:$0xff] %vm24, 0.0
    %46 = vst.msk [vmem:[#allocation3 + $0x28] sm:$0xff] %vm24, 0.0
    %47 = vst.msk [vmem:[#allocation3 + $0x30] sm:$0xff] %vm24, 0.0
    %48 = vst.msk [vmem:[#allocation3 + $0x38] sm:$0xff] %vm24, 0.0
    %49 = vst.msk [vmem:[#allocation3 + $0x40] sm:$0xff] %vm24, 0.0
    %50 = vst.msk [vmem:[#allocation3 + $0x48] sm:$0xff] %vm24, 0.0
    %51 = vst.msk [vmem:[#allocation3 + $0x50] sm:$0xff] %vm24, 0.0
    %52 = vst.msk [vmem:[#allocation3 + $0x58] sm:$0xff] %vm24, 0.0
    %53 = vst.msk [vmem:[#allocation3 + $0x60] sm:$0xff] %vm24, 0.0
    %54 = vst.msk [vmem:[#allocation3 + $0x68] sm:$0xff] %vm24, 0.0
    %55 = vst.msk [vmem:[#allocation3 + $0x70] sm:$0xff] %vm24, 0.0
    %56 = vst.msk [vmem:[#allocation3 + $0x78] sm:$0xff] %vm24, 0.0
    %57 = vst.msk [vmem:[#allocation4] sm:$0xff] %vm24, 0.0
    %58 = vst.msk [vmem:[#allocation4 + $0x8] sm:$0xff] %vm24, 0.0
    %59 = vst.msk [vmem:[#allocation4 + $0x10] sm:$0xff] %vm24, 0.0
    %60 = vst.msk [vmem:[#allocation4 + $0x18] sm:$0xff] %vm24, 0.0
    %61 = vst.msk [vmem:[#allocation4 + $0x20] sm:$0xff] %vm24, 0.0
    %62 = vst.msk [vmem:[#allocation4 + $0x28] sm:$0xff] %vm24, 0.0
    %63 = vst.msk [vmem:[#allocation4 + $0x30] sm:$0xff] %vm24, 0.0
    %64 = vst.msk [vmem:[#allocation4 + $0x38] sm:$0xff] %vm24, 0.0
    %65 = vst.msk [vmem:[#allocation4 + $0x40] sm:$0xff] %vm24, 0.0
    %66 = vst.msk [vmem:[#allocation4 + $0x48] sm:$0xff] %vm24, 0.0
    %67 = vst.msk [vmem:[#allocation4 + $0x50] sm:$0xff] %vm24, 0.0
    %68 = vst.msk [vmem:[#allocation4 + $0x58] sm:$0xff] %vm24, 0.0
    %69 = vst.msk [vmem:[#allocation4 + $0x60] sm:$0xff] %vm24, 0.0
    %70 = vst.msk [vmem:[#allocation4 + $0x68] sm:$0xff] %vm24, 0.0
    %71 = vst.msk [vmem:[#allocation4 + $0x70] sm:$0xff] %vm24, 0.0
    %72 = vst.msk [vmem:[#allocation4 + $0x78] sm:$0xff] %vm24, 0.0
  $region25: #{tpu_custom_call.1} parent=0 // pred_fallthru
    _
  %v73 = vld [vmem:[%s0] sm:$0xff]
  %v74 = vld [vmem:[%s0 + $0x8] sm:$0xff]
  %v75 = vld [vmem:[%s0 + $0x10] sm:$0xff]
  %v76 = vld [vmem:[%s0 + $0x18] sm:$0xff]
  %v77 = vld [vmem:[%s0 + $0x20] sm:$0xff]
  %v78 = vld [vmem:[%s0 + $0x28] sm:$0xff]
  %v79 = vld [vmem:[%s0 + $0x30] sm:$0xff]
  %v80 = vld [vmem:[%s0 + $0x38] sm:$0xff]
  %v81 = vld [vmem:[%s0 + $0x40] sm:$0xff]
  %v82 = vld [vmem:[%s0 + $0x48] sm:$0xff]
  %v83 = vld [vmem:[%s0 + $0x50] sm:$0xff]
  %v84 = vld [vmem:[%s0 + $0x58] sm:$0xff]
  %v85 = vld [vmem:[%s0 + $0x60] sm:$0xff]
  %v86 = vld [vmem:[%s0 + $0x68] sm:$0xff]
  %v87 = vld [vmem:[%s0 + $0x70] sm:$0xff]
  %v88 = vld [vmem:[%s0 + $0x78] sm:$0xff]
  %s89 = smul.u32 0, 128
  %s90 = scalar_lea.vmem %s1, %s89
  %v91 = vld [vmem:[%s90] sm:$0xff]
  %v92 = vld [vmem:[%s90 + $0x8] sm:$0xff]
  %v93 = vld [vmem:[%s90 + $0x10] sm:$0xff]
  %v94 = vld [vmem:[%s90 + $0x18] sm:$0xff]
  %v95 = vld [vmem:[%s90 + $0x20] sm:$0xff]
  %v96 = vld [vmem:[%s90 + $0x28] sm:$0xff]
  %v97 = vld [vmem:[%s90 + $0x30] sm:$0xff]
  %v98 = vld [vmem:[%s90 + $0x38] sm:$0xff]
  %v99 = vld [vmem:[%s90 + $0x40] sm:$0xff]
  %v100 = vld [vmem:[%s90 + $0x48] sm:$0xff]
  %v101 = vld [vmem:[%s90 + $0x50] sm:$0xff]
  %v102 = vld [vmem:[%s90 + $0x58] sm:$0xff]
  %v103 = vld [vmem:[%s90 + $0x60] sm:$0xff]
  %v104 = vld [vmem:[%s90 + $0x68] sm:$0xff]
  %v105 = vld [vmem:[%s90 + $0x70] sm:$0xff]
  %v106 = vld [vmem:[%s90 + $0x78] sm:$0xff]
  %107 = vmatpush.xpose.msra.mxu0 %v106
  %108 = vmatpush.xpose.msra.mxu0 %v105
  %109 = vmatpush.xpose.msra.mxu0 %v104
  %110 = vmatpush.xpose.msra.mxu0 %v103
  %111 = vmatpush.xpose.msra.mxu0 %v102
  %112 = vmatpush.xpose.msra.mxu0 %v101
  %113 = vmatpush.xpose.msra.mxu0 %v100
  %114 = vmatpush.xpose.msra.mxu0 %v99
  %115 = vmatpush.xpose.msra.mxu0 %v98
  %116 = vmatpush.xpose.msra.mxu0 %v97
  %117 = vmatpush.xpose.msra.mxu0 %v96
  %118 = vmatpush.xpose.msra.mxu0 %v95
  %119 = vmatpush.xpose.msra.mxu0 %v94
  %120 = vmatpush.xpose.msra.mxu0 %v93
  %121 = vmatpush.xpose.msra.mxu0 %v92
  %122 = vmatpush.xpose.msra.mxu0 %v91
  %123 = vmatmul.f32.gmra.mxu0 %v73
  %v124 = vpop.f32.mrf.mxu0
  %v125 = vadd.f32 0.0, %v124
  %126 = vmatmul.f32.gmra.mxu0 %v74
  %v127 = vpop.f32.mrf.mxu0
  %v128 = vadd.f32 0.0, %v127
  %129 = vmatmul.f32.gmra.mxu0 %v75
  %v130 = vpop.f32.mrf.mxu0
  %v131 = vadd.f32 0.0, %v130
  %132 = vmatmul.f32.gmra.mxu0 %v76
  %v133 = vpop.f32.mrf.mxu0
  %v134 = vadd.f32 0.0, %v133
  %135 = vmatmul.f32.gmra.mxu0 %v77
  %v136 = vpop.f32.mrf.mxu0
  %v137 = vadd.f32 0.0, %v136
  %138 = vmatmul.f32.gmra.mxu0 %v78
  %v139 = vpop.f32.mrf.mxu0
  %v140 = vadd.f32 0.0, %v139
  %141 = vmatmul.f32.gmra.mxu0 %v79
  %v142 = vpop.f32.mrf.mxu0
  %v143 = vadd.f32 0.0, %v142
  %144 = vmatmul.f32.gmra.mxu0 %v80
  %v145 = vpop.f32.mrf.mxu0
  %v146 = vadd.f32 0.0, %v145
  %147 = vmatmul.f32.gmra.mxu0 %v81
  %v148 = vpop.f32.mrf.mxu0
  %v149 = vadd.f32 0.0, %v148
  %150 = vmatmul.f32.gmra.mxu0 %v82
  %v151 = vpop.f32.mrf.mxu0
  %v152 = vadd.f32 0.0, %v151
  %153 = vmatmul.f32.gmra.mxu0 %v83
  %v154 = vpop.f32.mrf.mxu0
  %v155 = vadd.f32 0.0, %v154
  %156 = vmatmul.f32.gmra.mxu0 %v84
  %v157 = vpop.f32.mrf.mxu0
  %v158 = vadd.f32 0.0, %v157
  %159 = vmatmul.f32.gmra.mxu0 %v85
  %v160 = vpop.f32.mrf.mxu0
  %v161 = vadd.f32 0.0, %v160
  %162 = vmatmul.f32.gmra.mxu0 %v86
  %v163 = vpop.f32.mrf.mxu0
  %v164 = vadd.f32 0.0, %v163
  %165 = vmatmul.f32.gmra.mxu0 %v87
  %v166 = vpop.f32.mrf.mxu0
  %v167 = vadd.f32 0.0, %v166
  %168 = vmatmul.f32.gmra.mxu0 %v88
  %v169 = vpop.f32.mrf.mxu0
  %v170 = vadd.f32 0.0, %v169
  %171 = vdwg.mxu0
  %v172 = vld [vmem:[%s2] sm:$0xff]
  %v173 = vld [vmem:[%s2 + $0x8] sm:$0xff]
  %v174 = vld [vmem:[%s2 + $0x10] sm:$0xff]
  %v175 = vld [vmem:[%s2 + $0x18] sm:$0xff]
  %v176 = vld [vmem:[%s2 + $0x20] sm:$0xff]
  %v177 = vld [vmem:[%s2 + $0x28] sm:$0xff]
  %v178 = vld [vmem:[%s2 + $0x30] sm:$0xff]
  %v179 = vld [vmem:[%s2 + $0x38] sm:$0xff]
  %v180 = vld [vmem:[%s2 + $0x40] sm:$0xff]
  %v181 = vld [vmem:[%s2 + $0x48] sm:$0xff]
  %v182 = vld [vmem:[%s2 + $0x50] sm:$0xff]
  %v183 = vld [vmem:[%s2 + $0x58] sm:$0xff]
  %v184 = vld [vmem:[%s2 + $0x60] sm:$0xff]
  %v185 = vld [vmem:[%s2 + $0x68] sm:$0xff]
  %v186 = vld [vmem:[%s2 + $0x70] sm:$0xff]
  %v187 = vld [vmem:[%s2 + $0x78] sm:$0xff]
  %v188 = vld [vmem:[%s3] sm:$0x1]
  %189 = vset.pattern.permute.xlu0 0
  %190 = vperm.xlu0 %189, %v172
  %v191 = vpop.permute.xlu0 %190
  %192 = vset.pattern.permute.xlu0 0
  %193 = vperm.xlu0 %192, %v173
  %v194 = vpop.permute.xlu0 %193
  %195 = vset.pattern.permute.xlu0 0
  %196 = vperm.xlu0 %195, %v174
  %v197 = vpop.permute.xlu0 %196
  %198 = vset.pattern.permute.xlu0 0
  %199 = vperm.xlu0 %198, %v175
  %v200 = vpop.permute.xlu0 %199
  %201 = vset.pattern.permute.xlu0 0
  %202 = vperm.xlu0 %201, %v176
  %v203 = vpop.permute.xlu0 %202
  %204 = vset.pattern.permute.xlu0 0
  %205 = vperm.xlu0 %204, %v177
  %v206 = vpop.permute.xlu0 %205
  %207 = vset.pattern.permute.xlu0 0
  %208 = vperm.xlu0 %207, %v178
  %v209 = vpop.permute.xlu0 %208
  %210 = vset.pattern.permute.xlu0 0
  %211 = vperm.xlu0 %210, %v179
  %v212 = vpop.permute.xlu0 %211
  %213 = vset.pattern.permute.xlu0 0
  %214 = vperm.xlu0 %213, %v180
  %v215 = vpop.permute.xlu0 %214
  %216 = vset.pattern.permute.xlu0 0
  %217 = vperm.xlu0 %216, %v181
  %v218 = vpop.permute.xlu0 %217
  %219 = vset.pattern.permute.xlu0 0
  %220 = vperm.xlu0 %219, %v182
  %v221 = vpop.permute.xlu0 %220
  %222 = vset.pattern.permute.xlu0 0
  %223 = vperm.xlu0 %222, %v183
  %v224 = vpop.permute.xlu0 %223
  %225 = vset.pattern.permute.xlu0 0
  %226 = vperm.xlu0 %225, %v184
  %v227 = vpop.permute.xlu0 %226
  %228 = vset.pattern.permute.xlu0 0
  %229 = vperm.xlu0 %228, %v185
  %v230 = vpop.permute.xlu0 %229
  %231 = vset.pattern.permute.xlu0 0
  %232 = vperm.xlu0 %231, %v186
  %v233 = vpop.permute.xlu0 %232
  %234 = vset.pattern.permute.xlu0 0
  %235 = vperm.xlu0 %234, %v187
  %v236 = vpop.permute.xlu0 %235
  %v237 = vperm.slane %v188, 0
  %vm238 = vcmp.eq.s32.totalorder %v191, %v237
  %vm239 = vcmp.eq.s32.totalorder %v194, %v237
  %vm240 = vcmp.eq.s32.totalorder %v197, %v237
  %vm241 = vcmp.eq.s32.totalorder %v200, %v237
  %vm242 = vcmp.eq.s32.totalorder %v203, %v237
  %vm243 = vcmp.eq.s32.totalorder %v206, %v237
  %vm244 = vcmp.eq.s32.totalorder %v209, %v237
  %vm245 = vcmp.eq.s32.totalorder %v212, %v237
  %vm246 = vcmp.eq.s32.totalorder %v215, %v237
  %vm247 = vcmp.eq.s32.totalorder %v218, %v237
  %vm248 = vcmp.eq.s32.totalorder %v221, %v237
  %vm249 = vcmp.eq.s32.totalorder %v224, %v237
  %vm250 = vcmp.eq.s32.totalorder %v227, %v237
  %vm251 = vcmp.eq.s32.totalorder %v230, %v237
  %vm252 = vcmp.eq.s32.totalorder %v233, %v237
  %vm253 = vcmp.eq.s32.totalorder %v236, %v237
  %v254 = vld [vmem:[#allocation4] sm:$0xff]
  %v255 = vld [vmem:[#allocation4 + $0x8] sm:$0xff]
  %v256 = vld [vmem:[#allocation4 + $0x10] sm:$0xff]
  %v257 = vld [vmem:[#allocation4 + $0x18] sm:$0xff]
  %v258 = vld [vmem:[#allocation4 + $0x20] sm:$0xff]
  %v259 = vld [vmem:[#allocation4 + $0x28] sm:$0xff]
  %v260 = vld [vmem:[#allocation4 + $0x30] sm:$0xff]
  %v261 = vld [vmem:[#allocation4 + $0x38] sm:$0xff]
  %v262 = vld [vmem:[#allocation4 + $0x40] sm:$0xff]
  %v263 = vld [vmem:[#allocation4 + $0x48] sm:$0xff]
  %v264 = vld [vmem:[#allocation4 + $0x50] sm:$0xff]
  %v265 = vld [vmem:[#allocation4 + $0x58] sm:$0xff]
  %v266 = vld [vmem:[#allocation4 + $0x60] sm:$0xff]
  %v267 = vld [vmem:[#allocation4 + $0x68] sm:$0xff]
  %v268 = vld [vmem:[#allocation4 + $0x70] sm:$0xff]
  %v269 = vld [vmem:[#allocation4 + $0x78] sm:$0xff]
  %v270 = vsel %vm238, %v125, 0.0
  %v271 = vsel %vm239, %v128, 0.0
  %v272 = vsel %vm240, %v131, 0.0
  %v273 = vsel %vm241, %v134, 0.0
  %v274 = vsel %vm242, %v137, 0.0
  %v275 = vsel %vm243, %v140, 0.0
  %v276 = vsel %vm244, %v143, 0.0
  %v277 = vsel %vm245, %v146, 0.0
  %v278 = vsel %vm246, %v149, 0.0
  %v279 = vsel %vm247, %v152, 0.0
  %v280 = vsel %vm248, %v155, 0.0
  %v281 = vsel %vm249, %v158, 0.0
  %v282 = vsel %vm250, %v161, 0.0
  %v283 = vsel %vm251, %v164, 0.0
  %v284 = vsel %vm252, %v167, 0.0
  %v285 = vsel %vm253, %v170, 0.0
  %286 = vadd.xlane.f32.xlu0 %v270
  %v287 = vpop.xlane.xlu0 %286
  %288 = vadd.xlane.f32.xlu0 %v271
  %v289 = vpop.xlane.xlu0 %288
  %290 = vadd.xlane.f32.xlu0 %v272
  %v291 = vpop.xlane.xlu0 %290
  %292 = vadd.xlane.f32.xlu0 %v273
  %v293 = vpop.xlane.xlu0 %292
  %294 = vadd.xlane.f32.xlu0 %v274
  %v295 = vpop.xlane.xlu0 %294
  %296 = vadd.xlane.f32.xlu0 %v275
  %v297 = vpop.xlane.xlu0 %296
  %298 = vadd.xlane.f32.xlu0 %v276
  %v299 = vpop.xlane.xlu0 %298
  %300 = vadd.xlane.f32.xlu0 %v277
  %v301 = vpop.xlane.xlu0 %300
  %302 = vadd.xlane.f32.xlu0 %v278
  %v303 = vpop.xlane.xlu0 %302
  %304 = vadd.xlane.f32.xlu0 %v279
  %v305 = vpop.xlane.xlu0 %304
  %306 = vadd.xlane.f32.xlu0 %v280
  %v307 = vpop.xlane.xlu0 %306
  %308 = vadd.xlane.f32.xlu0 %v281
  %v309 = vpop.xlane.xlu0 %308
  %310 = vadd.xlane.f32.xlu0 %v282
  %v311 = vpop.xlane.xlu0 %310
  %312 = vadd.xlane.f32.xlu0 %v283
  %v313 = vpop.xlane.xlu0 %312
  %314 = vadd.xlane.f32.xlu0 %v284
  %v315 = vpop.xlane.xlu0 %314
  %316 = vadd.xlane.f32.xlu0 %v285
  %v317 = vpop.xlane.xlu0 %316
  %v318 = vadd.f32 %v254, %v287
  %v319 = vadd.f32 %v255, %v289
  %v320 = vadd.f32 %v256, %v291
  %v321 = vadd.f32 %v257, %v293
  %v322 = vadd.f32 %v258, %v295
  %v323 = vadd.f32 %v259, %v297
  %v324 = vadd.f32 %v260, %v299
  %v325 = vadd.f32 %v261, %v301
  %v326 = vadd.f32 %v262, %v303
  %v327 = vadd.f32 %v263, %v305
  %v328 = vadd.f32 %v264, %v307
  %v329 = vadd.f32 %v265, %v309
  %v330 = vadd.f32 %v266, %v311
  %v331 = vadd.f32 %v267, %v313
  %v332 = vadd.f32 %v268, %v315
  %v333 = vadd.f32 %v269, %v317
  %vm334 = vcmask 7168
  %335 = vst.msk [vmem:[#allocation4] sm:$0xff] %vm334, %v318
  %336 = vst.msk [vmem:[#allocation4 + $0x8] sm:$0xff] %vm334, %v319
  %337 = vst.msk [vmem:[#allocation4 + $0x10] sm:$0xff] %vm334, %v320
  %338 = vst.msk [vmem:[#allocation4 + $0x18] sm:$0xff] %vm334, %v321
  %339 = vst.msk [vmem:[#allocation4 + $0x20] sm:$0xff] %vm334, %v322
  %340 = vst.msk [vmem:[#allocation4 + $0x28] sm:$0xff] %vm334, %v323
  %341 = vst.msk [vmem:[#allocation4 + $0x30] sm:$0xff] %vm334, %v324
  %342 = vst.msk [vmem:[#allocation4 + $0x38] sm:$0xff] %vm334, %v325
  %343 = vst.msk [vmem:[#allocation4 + $0x40] sm:$0xff] %vm334, %v326
  %344 = vst.msk [vmem:[#allocation4 + $0x48] sm:$0xff] %vm334, %v327
  %345 = vst.msk [vmem:[#allocation4 + $0x50] sm:$0xff] %vm334, %v328
  %346 = vst.msk [vmem:[#allocation4 + $0x58] sm:$0xff] %vm334, %v329
  %347 = vst.msk [vmem:[#allocation4 + $0x60] sm:$0xff] %vm334, %v330
  %348 = vst.msk [vmem:[#allocation4 + $0x68] sm:$0xff] %vm334, %v331
  %349 = vst.msk [vmem:[#allocation4 + $0x70] sm:$0xff] %vm334, %v332
  %350 = vst.msk [vmem:[#allocation4 + $0x78] sm:$0xff] %vm334, %v333
  %s351 = smul.u32 0, 128
  %s352 = sadd.s32 %s89, 128
  %p353 = scmp.lt.s32.totalorder %s351, %s352
  %s354 = sadd.s32 %s351, 128
  %p355 = scmp.lt.s32.totalorder %s89, %s354
  %p356 = pnand %p353, %p355
  %p357 = pneg %p356
  %p358 = por %p357, %p20
  // Predicated region
  $region26: #{tpu_custom_call.1} parent=0 // pred_check
    %p359 = pneg %p358
  $region27: #{tpu_custom_call.1} parent=0 // pred_check_branch
    %361 = sbr.rel (%p359) target = $region29
  $region28: #{tpu_custom_call.1} parent=0 // pred_region
    %v362 = vlaneseq
    %v363 = vshrl.u32 %v362, 7
    %v364 = vadd.s32 %v363, 8
    %v365 = vadd.s32 %v363, 16
    %v366 = vadd.s32 %v363, 24
    %v367 = vadd.s32 %v363, 32
    %v368 = vadd.s32 %v363, 40
    %v369 = vadd.s32 %v363, 48
    %v370 = vadd.s32 %v363, 56
    %v371 = vadd.s32 %v363, 64
    %v372 = vadd.s32 %v363, 72
    %v373 = vadd.s32 %v363, 80
    %v374 = vadd.s32 %v363, 88
    %v375 = vadd.s32 %v363, 96
    %v376 = vadd.s32 %v363, 104
    %v377 = vadd.s32 %v363, 112
    %v378 = vadd.s32 %v363, 120
    %v379 = vstv %s351
    %v380 = vadd.s32 %v379, %v363
    %v381 = vadd.s32 %v379, %v364
    %v382 = vadd.s32 %v379, %v365
    %v383 = vadd.s32 %v379, %v366
    %v384 = vadd.s32 %v379, %v367
    %v385 = vadd.s32 %v379, %v368
    %v386 = vadd.s32 %v379, %v369
    %v387 = vadd.s32 %v379, %v370
    %v388 = vadd.s32 %v379, %v371
    %v389 = vadd.s32 %v379, %v372
    %v390 = vadd.s32 %v379, %v373
    %v391 = vadd.s32 %v379, %v374
    %v392 = vadd.s32 %v379, %v375
    %v393 = vadd.s32 %v379, %v376
    %v394 = vadd.s32 %v379, %v377
    %v395 = vadd.s32 %v379, %v378
    %v396 = vlaneseq
    %v397 = vand.u32 %v396, 127
    %v398 = vstv %s89
    %v399 = vadd.s32 %v398, %v397
    %vm400 = vcmp.ne.s32.totalorder %v380, %v399
    %vm401 = vcmp.ne.s32.totalorder %v381, %v399
    %vm402 = vcmp.ne.s32.totalorder %v382, %v399
    %vm403 = vcmp.ne.s32.totalorder %v383, %v399
    %vm404 = vcmp.ne.s32.totalorder %v384, %v399
    %vm405 = vcmp.ne.s32.totalorder %v385, %v399
    %vm406 = vcmp.ne.s32.totalorder %v386, %v399
    %vm407 = vcmp.ne.s32.totalorder %v387, %v399
    %vm408 = vcmp.ne.s32.totalorder %v388, %v399
    %vm409 = vcmp.ne.s32.totalorder %v389, %v399
    %vm410 = vcmp.ne.s32.totalorder %v390, %v399
    %vm411 = vcmp.ne.s32.totalorder %v391, %v399
    %vm412 = vcmp.ne.s32.totalorder %v392, %v399
    %vm413 = vcmp.ne.s32.totalorder %v393, %v399
    %vm414 = vcmp.ne.s32.totalorder %v394, %v399
    %vm415 = vcmp.ne.s32.totalorder %v395, %v399
    %vm416 = vcmp.ge.s32.totalorder %v188, 0
    %v417 = vsel %vm416, 1, 0
    %v418 = vperm.slane %v417, 0
    %vm419 = vcmp.eq.s32.totalorder %v418, 1
    %vm420 = vmand %vm400, %vm419
    %vm421 = vmand %vm401, %vm419
    %vm422 = vmand %vm402, %vm419
    %vm423 = vmand %vm403, %vm419
    %vm424 = vmand %vm404, %vm419
    %vm425 = vmand %vm405, %vm419
    %vm426 = vmand %vm406, %vm419
    %vm427 = vmand %vm407, %vm419
    %vm428 = vmand %vm408, %vm419
    %vm429 = vmand %vm409, %vm419
    %vm430 = vmand %vm410, %vm419
    %vm431 = vmand %vm411, %vm419
    %vm432 = vmand %vm412, %vm419
    %vm433 = vmand %vm413, %vm419
    %vm434 = vmand %vm414, %vm419
    %vm435 = vmand %vm415, %vm419
    %v436 = vsel %vm420, %v125, -1e+30
    %v437 = vsel %vm421, %v128, -1e+30
    %v438 = vsel %vm422, %v131, -1e+30
    %v439 = vsel %vm423, %v134, -1e+30
    %v440 = vsel %vm424, %v137, -1e+30
    %v441 = vsel %vm425, %v140, -1e+30
    %v442 = vsel %vm426, %v143, -1e+30
    %v443 = vsel %vm427, %v146, -1e+30
    %v444 = vsel %vm428, %v149, -1e+30
    %v445 = vsel %vm429, %v152, -1e+30
    %v446 = vsel %vm430, %v155, -1e+30
    %v447 = vsel %vm431, %v158, -1e+30
    %v448 = vsel %vm432, %v161, -1e+30
    %v449 = vsel %vm433, %v164, -1e+30
    %v450 = vsel %vm434, %v167, -1e+30
    %v451 = vsel %vm435, %v170, -1e+30
    %v452 = vld [vmem:[#allocation2] sm:$0xff]
    %v453 = vld [vmem:[#allocation2 + $0x8] sm:$0xff]
    %v454 = vld [vmem:[#allocation2 + $0x10] sm:$0xff]
    %v455 = vld [vmem:[#allocation2 + $0x18] sm:$0xff]
    %v456 = vld [vmem:[#allocation2 + $0x20] sm:$0xff]
    %v457 = vld [vmem:[#allocation2 + $0x28] sm:$0xff]
    %v458 = vld [vmem:[#allocation2 + $0x30] sm:$0xff]
    %v459 = vld [vmem:[#allocation2 + $0x38] sm:$0xff]
    %v460 = vld [vmem:[#allocation2 + $0x40] sm:$0xff]
    %v461 = vld [vmem:[#allocation2 + $0x48] sm:$0xff]
    %v462 = vld [vmem:[#allocation2 + $0x50] sm:$0xff]
    %v463 = vld [vmem:[#allocation2 + $0x58] sm:$0xff]
    %v464 = vld [vmem:[#allocation2 + $0x60] sm:$0xff]
    %v465 = vld [vmem:[#allocation2 + $0x68] sm:$0xff]
    %v466 = vld [vmem:[#allocation2 + $0x70] sm:$0xff]
    %v467 = vld [vmem:[#allocation2 + $0x78] sm:$0xff]
    %468 = vmax.xlane.f32.xlu0 %v436
    %v469 = vpop.xlane.xlu0 %468
    %470 = vmax.xlane.f32.xlu0 %v437
    %v471 = vpop.xlane.xlu0 %470
    %472 = vmax.xlane.f32.xlu0 %v438
    %v473 = vpop.xlane.xlu0 %472
    %474 = vmax.xlane.f32.xlu0 %v439
    %v475 = vpop.xlane.xlu0 %474
    %476 = vmax.xlane.f32.xlu0 %v440
    %v477 = vpop.xlane.xlu0 %476
    %478 = vmax.xlane.f32.xlu0 %v441
    %v479 = vpop.xlane.xlu0 %478
    %480 = vmax.xlane.f32.xlu0 %v442
    %v481 = vpop.xlane.xlu0 %480
    %482 = vmax.xlane.f32.xlu0 %v443
    %v483 = vpop.xlane.xlu0 %482
    %484 = vmax.xlane.f32.xlu0 %v444
    %v485 = vpop.xlane.xlu0 %484
    %486 = vmax.xlane.f32.xlu0 %v445
    %v487 = vpop.xlane.xlu0 %486
    %488 = vmax.xlane.f32.xlu0 %v446
    %v489 = vpop.xlane.xlu0 %488
    %490 = vmax.xlane.f32.xlu0 %v447
    %v491 = vpop.xlane.xlu0 %490
    %492 = vmax.xlane.f32.xlu0 %v448
    %v493 = vpop.xlane.xlu0 %492
    %494 = vmax.xlane.f32.xlu0 %v449
    %v495 = vpop.xlane.xlu0 %494
    %496 = vmax.xlane.f32.xlu0 %v450
    %v497 = vpop.xlane.xlu0 %496
    %498 = vmax.xlane.f32.xlu0 %v451
    %v499 = vpop.xlane.xlu0 %498
    %v500 = vmax.f32 %v452, %v469
    %v501 = vmax.f32 %v453, %v471
    %v502 = vmax.f32 %v454, %v473
    %v503 = vmax.f32 %v455, %v475
    %v504 = vmax.f32 %v456, %v477
    %v505 = vmax.f32 %v457, %v479
    %v506 = vmax.f32 %v458, %v481
    %v507 = vmax.f32 %v459, %v483
    %v508 = vmax.f32 %v460, %v485
    %v509 = vmax.f32 %v461, %v487
    %v510 = vmax.f32 %v462, %v489
    %v511 = vmax.f32 %v463, %v491
    %v512 = vmax.f32 %v464, %v493
    %v513 = vmax.f32 %v465, %v495
    %v514 = vmax.f32 %v466, %v497
    %v515 = vmax.f32 %v467, %v499
    %v516 = vsub.f32 %v452, %v500
    %v517 = vsub.f32 %v453, %v501
    %v518 = vsub.f32 %v454, %v502
    %v519 = vsub.f32 %v455, %v503
    %v520 = vsub.f32 %v456, %v504
    %v521 = vsub.f32 %v457, %v505
    %v522 = vsub.f32 %v458, %v506
    %v523 = vsub.f32 %v459, %v507
    %v524 = vsub.f32 %v460, %v508
    %v525 = vsub.f32 %v461, %v509
    %v526 = vsub.f32 %v462, %v510
    %v527 = vsub.f32 %v463, %v511
    %v528 = vsub.f32 %v464, %v512
    %v529 = vsub.f32 %v465, %v513
    %v530 = vsub.f32 %v466, %v514
    %v531 = vsub.f32 %v467, %v515
    %v532 = vmul.f32 %v516, 1.442695
    %v533 = vpow.pop %v532
    %v534 = vmul.f32 %v517, 1.442695
    %v535 = vpow.pop %v534
    %v536 = vmul.f32 %v518, 1.442695
    %v537 = vpow.pop %v536
    %v538 = vmul.f32 %v519, 1.442695
    %v539 = vpow.pop %v538
    %v540 = vmul.f32 %v520, 1.442695
    %v541 = vpow.pop %v540
    %v542 = vmul.f32 %v521, 1.442695
    %v543 = vpow.pop %v542
    %v544 = vmul.f32 %v522, 1.442695
    %v545 = vpow.pop %v544
    %v546 = vmul.f32 %v523, 1.442695
    %v547 = vpow.pop %v546
    %v548 = vmul.f32 %v524, 1.442695
    %v549 = vpow.pop %v548
    %v550 = vmul.f32 %v525, 1.442695
    %v551 = vpow.pop %v550
    %v552 = vmul.f32 %v526, 1.442695
    %v553 = vpow.pop %v552
    %v554 = vmul.f32 %v527, 1.442695
    %v555 = vpow.pop %v554
    %v556 = vmul.f32 %v528, 1.442695
    %v557 = vpow.pop %v556
    %v558 = vmul.f32 %v529, 1.442695
    %v559 = vpow.pop %v558
    %v560 = vmul.f32 %v530, 1.442695
    %v561 = vpow.pop %v560
    %v562 = vmul.f32 %v531, 1.442695
    %v563 = vpow.pop %v562
    %v564 = vld [vmem:[#allocation3] sm:$0xff]
    %v565 = vld [vmem:[#allocation3 + $0x8] sm:$0xff]
    %v566 = vld [vmem:[#allocation3 + $0x10] sm:$0xff]
    %v567 = vld [vmem:[#allocation3 + $0x18] sm:$0xff]
    %v568 = vld [vmem:[#allocation3 + $0x20] sm:$0xff]
    %v569 = vld [vmem:[#allocation3 + $0x28] sm:$0xff]
    %v570 = vld [vmem:[#allocation3 + $0x30] sm:$0xff]
    %v571 = vld [vmem:[#allocation3 + $0x38] sm:$0xff]
    %v572 = vld [vmem:[#allocation3 + $0x40] sm:$0xff]
    %v573 = vld [vmem:[#allocation3 + $0x48] sm:$0xff]
    %v574 = vld [vmem:[#allocation3 + $0x50] sm:$0xff]
    %v575 = vld [vmem:[#allocation3 + $0x58] sm:$0xff]
    %v576 = vld [vmem:[#allocation3 + $0x60] sm:$0xff]
    %v577 = vld [vmem:[#allocation3 + $0x68] sm:$0xff]
    %v578 = vld [vmem:[#allocation3 + $0x70] sm:$0xff]
    %v579 = vld [vmem:[#allocation3 + $0x78] sm:$0xff]
    %v580 = vmul.f32 %v533, %v564
    %v581 = vmul.f32 %v535, %v565
    %v582 = vmul.f32 %v537, %v566
    %v583 = vmul.f32 %v539, %v567
    %v584 = vmul.f32 %v541, %v568
    %v585 = vmul.f32 %v543, %v569
    %v586 = vmul.f32 %v545, %v570
    %v587 = vmul.f32 %v547, %v571
    %v588 = vmul.f32 %v549, %v572
    %v589 = vmul.f32 %v551, %v573
    %v590 = vmul.f32 %v553, %v574
    %v591 = vmul.f32 %v555, %v575
    %v592 = vmul.f32 %v557, %v576
    %v593 = vmul.f32 %v559, %v577
    %v594 = vmul.f32 %v561, %v578
    %v595 = vmul.f32 %v563, %v579
    %597 = vset.pattern.permute.xlu0 0
    %598 = vperm.xlu0 %597, %v500
    %v599 = vpop.permute.xlu0 %598
    %602 = vset.pattern.permute.xlu0 0
    %603 = vperm.xlu0 %602, %v501
    %v604 = vpop.permute.xlu0 %603
    %607 = vset.pattern.permute.xlu0 0
    %608 = vperm.xlu0 %607, %v502
    %v609 = vpop.permute.xlu0 %608
    %612 = vset.pattern.permute.xlu0 0
    %613 = vperm.xlu0 %612, %v503
    %v614 = vpop.permute.xlu0 %613
    %617 = vset.pattern.permute.xlu0 0
    %618 = vperm.xlu0 %617, %v504
    %v619 = vpop.permute.xlu0 %618
    %622 = vset.pattern.permute.xlu0 0
    %623 = vperm.xlu0 %622, %v505
    %v624 = vpop.permute.xlu0 %623
    %627 = vset.pattern.permute.xlu0 0
    %628 = vperm.xlu0 %627, %v506
    %v629 = vpop.permute.xlu0 %628
    %632 = vset.pattern.permute.xlu0 0
    %633 = vperm.xlu0 %632, %v507
    %v634 = vpop.permute.xlu0 %633
    %637 = vset.pattern.permute.xlu0 0
    %638 = vperm.xlu0 %637, %v508
    %v639 = vpop.permute.xlu0 %638
    %642 = vset.pattern.permute.xlu0 0
    %643 = vperm.xlu0 %642, %v509
    %v644 = vpop.permute.xlu0 %643
    %647 = vset.pattern.permute.xlu0 0
    %648 = vperm.xlu0 %647, %v510
    %v649 = vpop.permute.xlu0 %648
    %652 = vset.pattern.permute.xlu0 0
    %653 = vperm.xlu0 %652, %v511
    %v654 = vpop.permute.xlu0 %653
    %657 = vset.pattern.permute.xlu0 0
    %658 = vperm.xlu0 %657, %v512
    %v659 = vpop.permute.xlu0 %658
    %662 = vset.pattern.permute.xlu0 0
    %663 = vperm.xlu0 %662, %v513
    %v664 = vpop.permute.xlu0 %663
    %667 = vset.pattern.permute.xlu0 0
    %668 = vperm.xlu0 %667, %v514
    %v669 = vpop.permute.xlu0 %668
    %672 = vset.pattern.permute.xlu0 0
    %673 = vperm.xlu0 %672, %v515
    %v674 = vpop.permute.xlu0 %673
    %v676 = vsub.f32 %v436, %v599
    %v677 = vsub.f32 %v437, %v604
    %v678 = vsub.f32 %v438, %v609
    %v679 = vsub.f32 %v439, %v614
    %v680 = vsub.f32 %v440, %v619
    %v681 = vsub.f32 %v441, %v624
    %v682 = vsub.f32 %v442, %v629
    %v683 = vsub.f32 %v443, %v634
    %v684 = vsub.f32 %v444, %v639
    %v685 = vsub.f32 %v445, %v644
    %v686 = vsub.f32 %v446, %v649
    %v687 = vsub.f32 %v447, %v654
    %v688 = vsub.f32 %v448, %v659
    %v689 = vsub.f32 %v449, %v664
    %v690 = vsub.f32 %v450, %v669
    %v691 = vsub.f32 %v451, %v674
    %v692 = vmul.f32 %v676, 1.442695
    %v693 = vpow.pop %v692
    %v694 = vmul.f32 %v677, 1.442695
    %v695 = vpow.pop %v694
    %v696 = vmul.f32 %v678, 1.442695
    %v697 = vpow.pop %v696
    %v698 = vmul.f32 %v679, 1.442695
    %v699 = vpow.pop %v698
    %v700 = vmul.f32 %v680, 1.442695
    %v701 = vpow.pop %v700
    %v702 = vmul.f32 %v681, 1.442695
    %v703 = vpow.pop %v702
    %v704 = vmul.f32 %v682, 1.442695
    %v705 = vpow.pop %v704
    %v706 = vmul.f32 %v683, 1.442695
    %v707 = vpow.pop %v706
    %v708 = vmul.f32 %v684, 1.442695
    %v709 = vpow.pop %v708
    %v710 = vmul.f32 %v685, 1.442695
    %v711 = vpow.pop %v710
    %v712 = vmul.f32 %v686, 1.442695
    %v713 = vpow.pop %v712
    %v714 = vmul.f32 %v687, 1.442695
    %v715 = vpow.pop %v714
    %v716 = vmul.f32 %v688, 1.442695
    %v717 = vpow.pop %v716
    %v718 = vmul.f32 %v689, 1.442695
    %v719 = vpow.pop %v718
    %v720 = vmul.f32 %v690, 1.442695
    %v721 = vpow.pop %v720
    %v722 = vmul.f32 %v691, 1.442695
    %v723 = vpow.pop %v722
    %724 = vadd.xlane.f32.xlu0 %v693
    %v725 = vpop.xlane.xlu0 %724
    %726 = vadd.xlane.f32.xlu0 %v695
    %v727 = vpop.xlane.xlu0 %726
    %728 = vadd.xlane.f32.xlu0 %v697
    %v729 = vpop.xlane.xlu0 %728
    %730 = vadd.xlane.f32.xlu0 %v699
    %v731 = vpop.xlane.xlu0 %730
    %732 = vadd.xlane.f32.xlu0 %v701
    %v733 = vpop.xlane.xlu0 %732
    %734 = vadd.xlane.f32.xlu0 %v703
    %v735 = vpop.xlane.xlu0 %734
    %736 = vadd.xlane.f32.xlu0 %v705
    %v737 = vpop.xlane.xlu0 %736
    %738 = vadd.xlane.f32.xlu0 %v707
    %v739 = vpop.xlane.xlu0 %738
    %740 = vadd.xlane.f32.xlu0 %v709
    %v741 = vpop.xlane.xlu0 %740
    %742 = vadd.xlane.f32.xlu0 %v711
    %v743 = vpop.xlane.xlu0 %742
    %744 = vadd.xlane.f32.xlu0 %v713
    %v745 = vpop.xlane.xlu0 %744
    %746 = vadd.xlane.f32.xlu0 %v715
    %v747 = vpop.xlane.xlu0 %746
    %748 = vadd.xlane.f32.xlu0 %v717
    %v749 = vpop.xlane.xlu0 %748
    %750 = vadd.xlane.f32.xlu0 %v719
    %v751 = vpop.xlane.xlu0 %750
    %752 = vadd.xlane.f32.xlu0 %v721
    %v753 = vpop.xlane.xlu0 %752
    %754 = vadd.xlane.f32.xlu0 %v723
    %v755 = vpop.xlane.xlu0 %754
    %v756 = vadd.f32 %v580, %v725
    %v757 = vadd.f32 %v581, %v727
    %v758 = vadd.f32 %v582, %v729
    %v759 = vadd.f32 %v583, %v731
    %v760 = vadd.f32 %v584, %v733
    %v761 = vadd.f32 %v585, %v735
    %v762 = vadd.f32 %v586, %v737
    %v763 = vadd.f32 %v587, %v739
    %v764 = vadd.f32 %v588, %v741
    %v765 = vadd.f32 %v589, %v743
    %v766 = vadd.f32 %v590, %v745
    %v767 = vadd.f32 %v591, %v747
    %v768 = vadd.f32 %v592, %v749
    %v769 = vadd.f32 %v593, %v751
    %v770 = vadd.f32 %v594, %v753
    %v771 = vadd.f32 %v595, %v755
    %772 = vst.msk [vmem:[#allocation3] sm:$0xff] %vm334, %v756
    %773 = vst.msk [vmem:[#allocation3 + $0x8] sm:$0xff] %vm334, %v757
    %774 = vst.msk [vmem:[#allocation3 + $0x10] sm:$0xff] %vm334, %v758
    %775 = vst.msk [vmem:[#allocation3 + $0x18] sm:$0xff] %vm334, %v759
    %776 = vst.msk [vmem:[#allocation3 + $0x20] sm:$0xff] %vm334, %v760
    %777 = vst.msk [vmem:[#allocation3 + $0x28] sm:$0xff] %vm334, %v761
    %778 = vst.msk [vmem:[#allocation3 + $0x30] sm:$0xff] %vm334, %v762
    %779 = vst.msk [vmem:[#allocation3 + $0x38] sm:$0xff] %vm334, %v763
    %780 = vst.msk [vmem:[#allocation3 + $0x40] sm:$0xff] %vm334, %v764
    %781 = vst.msk [vmem:[#allocation3 + $0x48] sm:$0xff] %vm334, %v765
    %782 = vst.msk [vmem:[#allocation3 + $0x50] sm:$0xff] %vm334, %v766
    %783 = vst.msk [vmem:[#allocation3 + $0x58] sm:$0xff] %vm334, %v767
    %784 = vst.msk [vmem:[#allocation3 + $0x60] sm:$0xff] %vm334, %v768
    %785 = vst.msk [vmem:[#allocation3 + $0x68] sm:$0xff] %vm334, %v769
    %786 = vst.msk [vmem:[#allocation3 + $0x70] sm:$0xff] %vm334, %v770
    %787 = vst.msk [vmem:[#allocation3 + $0x78] sm:$0xff] %vm334, %v771
    %788 = vst.msk [vmem:[#allocation2] sm:$0xff] %vm334, %v500
    %789 = vst.msk [vmem:[#allocation2 + $0x8] sm:$0xff] %vm334, %v501
    %790 = vst.msk [vmem:[#allocation2 + $0x10] sm:$0xff] %vm334, %v502
    %791 = vst.msk [vmem:[#allocation2 + $0x18] sm:$0xff] %vm334, %v503
    %792 = vst.msk [vmem:[#allocation2 + $0x20] sm:$0xff] %vm334, %v504
    %793 = vst.msk [vmem:[#allocation2 + $0x28] sm:$0xff] %vm334, %v505
    %794 = vst.msk [vmem:[#allocation2 + $0x30] sm:$0xff] %vm334, %v506
    %795 = vst.msk [vmem:[#allocation2 + $0x38] sm:$0xff] %vm334, %v507
    %796 = vst.msk [vmem:[#allocation2 + $0x40] sm:$0xff] %vm334, %v508
    %797 = vst.msk [vmem:[#allocation2 + $0x48] sm:$0xff] %vm334, %v509
    %798 = vst.msk [vmem:[#allocation2 + $0x50] sm:$0xff] %vm334, %v510
    %799 = vst.msk [vmem:[#allocation2 + $0x58] sm:$0xff] %vm334, %v511
    %800 = vst.msk [vmem:[#allocation2 + $0x60] sm:$0xff] %vm334, %v512
    %801 = vst.msk [vmem:[#allocation2 + $0x68] sm:$0xff] %vm334, %v513
    %802 = vst.msk [vmem:[#allocation2 + $0x70] sm:$0xff] %vm334, %v514
    %803 = vst.msk [vmem:[#allocation2 + $0x78] sm:$0xff] %vm334, %v515
  $region29: #{tpu_custom_call.1} parent=0 // pred_fallthru
    _
  %p804 = pneg %p358
  // Predicated region
  $region30: #{tpu_custom_call.1} parent=0 // pred_check
    _
  $region31: #{tpu_custom_call.1} parent=0 // pred_check_branch
    %806 = sbr.rel (%p358) target = $region33
  $region32: #{tpu_custom_call.1} parent=0 // pred_region
    %v807 = vld [vmem:[#allocation2] sm:$0xff]
    %v808 = vld [vmem:[#allocation2 + $0x8] sm:$0xff]
    %v809 = vld [vmem:[#allocation2 + $0x10] sm:$0xff]
    %v810 = vld [vmem:[#allocation2 + $0x18] sm:$0xff]
    %v811 = vld [vmem:[#allocation2 + $0x20] sm:$0xff]
    %v812 = vld [vmem:[#allocation2 + $0x28] sm:$0xff]
    %v813 = vld [vmem:[#allocation2 + $0x30] sm:$0xff]
    %v814 = vld [vmem:[#allocation2 + $0x38] sm:$0xff]
    %v815 = vld [vmem:[#allocation2 + $0x40] sm:$0xff]
    %v816 = vld [vmem:[#allocation2 + $0x48] sm:$0xff]
    %v817 = vld [vmem:[#allocation2 + $0x50] sm:$0xff]
    %v818 = vld [vmem:[#allocation2 + $0x58] sm:$0xff]
    %v819 = vld [vmem:[#allocation2 + $0x60] sm:$0xff]
    %v820 = vld [vmem:[#allocation2 + $0x68] sm:$0xff]
    %v821 = vld [vmem:[#allocation2 + $0x70] sm:$0xff]
    %v822 = vld [vmem:[#allocation2 + $0x78] sm:$0xff]
    %823 = vmax.xlane.f32.xlu0 %v125
    %v824 = vpop.xlane.xlu0 %823
    %825 = vmax.xlane.f32.xlu0 %v128
    %v826 = vpop.xlane.xlu0 %825
    %827 = vmax.xlane.f32.xlu0 %v131
    %v828 = vpop.xlane.xlu0 %827
    %829 = vmax.xlane.f32.xlu0 %v134
    %v830 = vpop.xlane.xlu0 %829
    %831 = vmax.xlane.f32.xlu0 %v137
    %v832 = vpop.xlane.xlu0 %831
    %833 = vmax.xlane.f32.xlu0 %v140
    %v834 = vpop.xlane.xlu0 %833
    %835 = vmax.xlane.f32.xlu0 %v143
    %v836 = vpop.xlane.xlu0 %835
    %837 = vmax.xlane.f32.xlu0 %v146
    %v838 = vpop.xlane.xlu0 %837
    %839 = vmax.xlane.f32.xlu0 %v149
    %v840 = vpop.xlane.xlu0 %839
    %841 = vmax.xlane.f32.xlu0 %v152
    %v842 = vpop.xlane.xlu0 %841
    %843 = vmax.xlane.f32.xlu0 %v155
    %v844 = vpop.xlane.xlu0 %843
    %845 = vmax.xlane.f32.xlu0 %v158
    %v846 = vpop.xlane.xlu0 %845
    %847 = vmax.xlane.f32.xlu0 %v161
    %v848 = vpop.xlane.xlu0 %847
    %849 = vmax.xlane.f32.xlu0 %v164
    %v850 = vpop.xlane.xlu0 %849
    %851 = vmax.xlane.f32.xlu0 %v167
    %v852 = vpop.xlane.xlu0 %851
    %853 = vmax.xlane.f32.xlu0 %v170
    %v854 = vpop.xlane.xlu0 %853
    %v855 = vmax.f32 %v807, %v824
    %v856 = vmax.f32 %v808, %v826
    %v857 = vmax.f32 %v809, %v828
    %v858 = vmax.f32 %v810, %v830
    %v859 = vmax.f32 %v811, %v832
    %v860 = vmax.f32 %v812, %v834
    %v861 = vmax.f32 %v813, %v836
    %v862 = vmax.f32 %v814, %v838
    %v863 = vmax.f32 %v815, %v840
    %v864 = vmax.f32 %v816, %v842
    %v865 = vmax.f32 %v817, %v844
    %v866 = vmax.f32 %v818, %v846
    %v867 = vmax.f32 %v819, %v848
    %v868 = vmax.f32 %v820, %v850
    %v869 = vmax.f32 %v821, %v852
    %v870 = vmax.f32 %v822, %v854
    %v871 = vsub.f32 %v807, %v855
    %v872 = vsub.f32 %v808, %v856
    %v873 = vsub.f32 %v809, %v857
    %v874 = vsub.f32 %v810, %v858
    %v875 = vsub.f32 %v811, %v859
    %v876 = vsub.f32 %v812, %v860
    %v877 = vsub.f32 %v813, %v861
    %v878 = vsub.f32 %v814, %v862
    %v879 = vsub.f32 %v815, %v863
    %v880 = vsub.f32 %v816, %v864
    %v881 = vsub.f32 %v817, %v865
    %v882 = vsub.f32 %v818, %v866
    %v883 = vsub.f32 %v819, %v867
    %v884 = vsub.f32 %v820, %v868
    %v885 = vsub.f32 %v821, %v869
    %v886 = vsub.f32 %v822, %v870
    %v887 = vmul.f32 %v871, 1.442695
    %v888 = vpow.pop %v887
    %v889 = vmul.f32 %v872, 1.442695
    %v890 = vpow.pop %v889
    %v891 = vmul.f32 %v873, 1.442695
    %v892 = vpow.pop %v891
    %v893 = vmul.f32 %v874, 1.442695
    %v894 = vpow.pop %v893
    %v895 = vmul.f32 %v875, 1.442695
    %v896 = vpow.pop %v895
    %v897 = vmul.f32 %v876, 1.442695
    %v898 = vpow.pop %v897
    %v899 = vmul.f32 %v877, 1.442695
    %v900 = vpow.pop %v899
    %v901 = vmul.f32 %v878, 1.442695
    %v902 = vpow.pop %v901
    %v903 = vmul.f32 %v879, 1.442695
    %v904 = vpow.pop %v903
    %v905 = vmul.f32 %v880, 1.442695
    %v906 = vpow.pop %v905
    %v907 = vmul.f32 %v881, 1.442695
    %v908 = vpow.pop %v907
    %v909 = vmul.f32 %v882, 1.442695
    %v910 = vpow.pop %v909
    %v911 = vmul.f32 %v883, 1.442695
    %v912 = vpow.pop %v911
    %v913 = vmul.f32 %v884, 1.442695
    %v914 = vpow.pop %v913
    %v915 = vmul.f32 %v885, 1.442695
    %v916 = vpow.pop %v915
    %v917 = vmul.f32 %v886, 1.442695
    %v918 = vpow.pop %v917
    %v919 = vld [vmem:[#allocation3] sm:$0xff]
    %v920 = vld [vmem:[#allocation3 + $0x8] sm:$0xff]
    %v921 = vld [vmem:[#allocation3 + $0x10] sm:$0xff]
    %v922 = vld [vmem:[#allocation3 + $0x18] sm:$0xff]
    %v923 = vld [vmem:[#allocation3 + $0x20] sm:$0xff]
    %v924 = vld [vmem:[#allocation3 + $0x28] sm:$0xff]
    %v925 = vld [vmem:[#allocation3 + $0x30] sm:$0xff]
    %v926 = vld [vmem:[#allocation3 + $0x38] sm:$0xff]
    %v927 = vld [vmem:[#allocation3 + $0x40] sm:$0xff]
    %v928 = vld [vmem:[#allocation3 + $0x48] sm:$0xff]
    %v929 = vld [vmem:[#allocation3 + $0x50] sm:$0xff]
    %v930 = vld [vmem:[#allocation3 + $0x58] sm:$0xff]
    %v931 = vld [vmem:[#allocation3 + $0x60] sm:$0xff]
    %v932 = vld [vmem:[#allocation3 + $0x68] sm:$0xff]
    %v933 = vld [vmem:[#allocation3 + $0x70] sm:$0xff]
    %v934 = vld [vmem:[#allocation3 + $0x78] sm:$0xff]
    %v935 = vmul.f32 %v888, %v919
    %v936 = vmul.f32 %v890, %v920
    %v937 = vmul.f32 %v892, %v921
    %v938 = vmul.f32 %v894, %v922
    %v939 = vmul.f32 %v896, %v923
    %v940 = vmul.f32 %v898, %v924
    %v941 = vmul.f32 %v900, %v925
    %v942 = vmul.f32 %v902, %v926
    %v943 = vmul.f32 %v904, %v927
    %v944 = vmul.f32 %v906, %v928
    %v945 = vmul.f32 %v908, %v929
    %v946 = vmul.f32 %v910, %v930
    %v947 = vmul.f32 %v912, %v931
    %v948 = vmul.f32 %v914, %v932
    %v949 = vmul.f32 %v916, %v933
    %v950 = vmul.f32 %v918, %v934
    %952 = vset.pattern.permute.xlu0 0
    %953 = vperm.xlu0 %952, %v855
    %v954 = vpop.permute.xlu0 %953
    %957 = vset.pattern.permute.xlu0 0
    %958 = vperm.xlu0 %957, %v856
    %v959 = vpop.permute.xlu0 %958
    %962 = vset.pattern.permute.xlu0 0
    %963 = vperm.xlu0 %962, %v857
    %v964 = vpop.permute.xlu0 %963
    %967 = vset.pattern.permute.xlu0 0
    %968 = vperm.xlu0 %967, %v858
    %v969 = vpop.permute.xlu0 %968
    %972 = vset.pattern.permute.xlu0 0
    %973 = vperm.xlu0 %972, %v859
    %v974 = vpop.permute.xlu0 %973
    %977 = vset.pattern.permute.xlu0 0
    %978 = vperm.xlu0 %977, %v860
    %v979 = vpop.permute.xlu0 %978
    %982 = vset.pattern.permute.xlu0 0
    %983 = vperm.xlu0 %982, %v861
    %v984 = vpop.permute.xlu0 %983
    %987 = vset.pattern.permute.xlu0 0
    %988 = vperm.xlu0 %987, %v862
    %v989 = vpop.permute.xlu0 %988
    %992 = vset.pattern.permute.xlu0 0
    %993 = vperm.xlu0 %992, %v863
    %v994 = vpop.permute.xlu0 %993
    %997 = vset.pattern.permute.xlu0 0
    %998 = vperm.xlu0 %997, %v864
    %v999 = vpop.permute.xlu0 %998
    %1002 = vset.pattern.permute.xlu0 0
    %1003 = vperm.xlu0 %1002, %v865
    %v1004 = vpop.permute.xlu0 %1003
    %1007 = vset.pattern.permute.xlu0 0
    %1008 = vperm.xlu0 %1007, %v866
    %v1009 = vpop.permute.xlu0 %1008
    %1012 = vset.pattern.permute.xlu0 0
    %1013 = vperm.xlu0 %1012, %v867
    %v1014 = vpop.permute.xlu0 %1013
    %1017 = vset.pattern.permute.xlu0 0
    %1018 = vperm.xlu0 %1017, %v868
    %v1019 = vpop.permute.xlu0 %1018
    %1022 = vset.pattern.permute.xlu0 0
    %1023 = vperm.xlu0 %1022, %v869
    %v1024 = vpop.permute.xlu0 %1023
    %1027 = vset.pattern.permute.xlu0 0
    %1028 = vperm.xlu0 %1027, %v870
    %v1029 = vpop.permute.xlu0 %1028
    %v1031 = vsub.f32 %v125, %v954
    %v1032 = vsub.f32 %v128, %v959
    %v1033 = vsub.f32 %v131, %v964
    %v1034 = vsub.f32 %v134, %v969
    %v1035 = vsub.f32 %v137, %v974
    %v1036 = vsub.f32 %v140, %v979
    %v1037 = vsub.f32 %v143, %v984
    %v1038 = vsub.f32 %v146, %v989
    %v1039 = vsub.f32 %v149, %v994
    %v1040 = vsub.f32 %v152, %v999
    %v1041 = vsub.f32 %v155, %v1004
    %v1042 = vsub.f32 %v158, %v1009
    %v1043 = vsub.f32 %v161, %v1014
    %v1044 = vsub.f32 %v164, %v1019
    %v1045 = vsub.f32 %v167, %v1024
    %v1046 = vsub.f32 %v170, %v1029
    %v1047 = vmul.f32 %v1031, 1.442695
    %v1048 = vpow.pop %v1047
    %v1049 = vmul.f32 %v1032, 1.442695
    %v1050 = vpow.pop %v1049
    %v1051 = vmul.f32 %v1033, 1.442695
    %v1052 = vpow.pop %v1051
    %v1053 = vmul.f32 %v1034, 1.442695
    %v1054 = vpow.pop %v1053
    %v1055 = vmul.f32 %v1035, 1.442695
    %v1056 = vpow.pop %v1055
    %v1057 = vmul.f32 %v1036, 1.442695
    %v1058 = vpow.pop %v1057
    %v1059 = vmul.f32 %v1037, 1.442695
    %v1060 = vpow.pop %v1059
    %v1061 = vmul.f32 %v1038, 1.442695
    %v1062 = vpow.pop %v1061
    %v1063 = vmul.f32 %v1039, 1.442695
    %v1064 = vpow.pop %v1063
    %v1065 = vmul.f32 %v1040, 1.442695
    %v1066 = vpow.pop %v1065
    %v1067 = vmul.f32 %v1041, 1.442695
    %v1068 = vpow.pop %v1067
    %v1069 = vmul.f32 %v1042, 1.442695
    %v1070 = vpow.pop %v1069
    %v1071 = vmul.f32 %v1043, 1.442695
    %v1072 = vpow.pop %v1071
    %v1073 = vmul.f32 %v1044, 1.442695
    %v1074 = vpow.pop %v1073
    %v1075 = vmul.f32 %v1045, 1.442695
    %v1076 = vpow.pop %v1075
    %v1077 = vmul.f32 %v1046, 1.442695
    %v1078 = vpow.pop %v1077
    %1079 = vadd.xlane.f32.xlu0 %v1048
    %v1080 = vpop.xlane.xlu0 %1079
    %1081 = vadd.xlane.f32.xlu0 %v1050
    %v1082 = vpop.xlane.xlu0 %1081
    %1083 = vadd.xlane.f32.xlu0 %v1052
    %v1084 = vpop.xlane.xlu0 %1083
    %1085 = vadd.xlane.f32.xlu0 %v1054
    %v1086 = vpop.xlane.xlu0 %1085
    %1087 = vadd.xlane.f32.xlu0 %v1056
    %v1088 = vpop.xlane.xlu0 %1087
    %1089 = vadd.xlane.f32.xlu0 %v1058
    %v1090 = vpop.xlane.xlu0 %1089
    %1091 = vadd.xlane.f32.xlu0 %v1060
    %v1092 = vpop.xlane.xlu0 %1091
    %1093 = vadd.xlane.f32.xlu0 %v1062
    %v1094 = vpop.xlane.xlu0 %1093
    %1095 = vadd.xlane.f32.xlu0 %v1064
    %v1096 = vpop.xlane.xlu0 %1095
    %1097 = vadd.xlane.f32.xlu0 %v1066
    %v1098 = vpop.xlane.xlu0 %1097
    %1099 = vadd.xlane.f32.xlu0 %v1068
    %v1100 = vpop.xlane.xlu0 %1099
    %1101 = vadd.xlane.f32.xlu0 %v1070
    %v1102 = vpop.xlane.xlu0 %1101
    %1103 = vadd.xlane.f32.xlu0 %v1072
    %v1104 = vpop.xlane.xlu0 %1103
    %1105 = vadd.xlane.f32.xlu0 %v1074
    %v1106 = vpop.xlane.xlu0 %1105
    %1107 = vadd.xlane.f32.xlu0 %v1076
    %v1108 = vpop.xlane.xlu0 %1107
    %1109 = vadd.xlane.f32.xlu0 %v1078
    %v1110 = vpop.xlane.xlu0 %1109
    %v1111 = vadd.f32 %v935, %v1080
    %v1112 = vadd.f32 %v936, %v1082
    %v1113 = vadd.f32 %v937, %v1084
    %v1114 = vadd.f32 %v938, %v1086
    %v1115 = vadd.f32 %v939, %v1088
    %v1116 = vadd.f32 %v940, %v1090
    %v1117 = vadd.f32 %v941, %v1092
    %v1118 = vadd.f32 %v942, %v1094
    %v1119 = vadd.f32 %v943, %v1096
    %v1120 = vadd.f32 %v944, %v1098
    %v1121 = vadd.f32 %v945, %v1100
    %v1122 = vadd.f32 %v946, %v1102
    %v1123 = vadd.f32 %v947, %v1104
    %v1124 = vadd.f32 %v948, %v1106
    %v1125 = vadd.f32 %v949, %v1108
    %v1126 = vadd.f32 %v950, %v1110
    %1127 = vst.msk [vmem:[#allocation3] sm:$0xff] %vm334, %v1111
    %1128 = vst.msk [vmem:[#allocation3 + $0x8] sm:$0xff] %vm334, %v1112
    %1129 = vst.msk [vmem:[#allocation3 + $0x10] sm:$0xff] %vm334, %v1113
    %1130 = vst.msk [vmem:[#allocation3 + $0x18] sm:$0xff] %vm334, %v1114
    %1131 = vst.msk [vmem:[#allocation3 + $0x20] sm:$0xff] %vm334, %v1115
    %1132 = vst.msk [vmem:[#allocation3 + $0x28] sm:$0xff] %vm334, %v1116
    %1133 = vst.msk [vmem:[#allocation3 + $0x30] sm:$0xff] %vm334, %v1117
    %1134 = vst.msk [vmem:[#allocation3 + $0x38] sm:$0xff] %vm334, %v1118
    %1135 = vst.msk [vmem:[#allocation3 + $0x40] sm:$0xff] %vm334, %v1119
    %1136 = vst.msk [vmem:[#allocation3 + $0x48] sm:$0xff] %vm334, %v1120
    %1137 = vst.msk [vmem:[#allocation3 + $0x50] sm:$0xff] %vm334, %v1121
    %1138 = vst.msk [vmem:[#allocation3 + $0x58] sm:$0xff] %vm334, %v1122
    %1139 = vst.msk [vmem:[#allocation3 + $0x60] sm:$0xff] %vm334, %v1123
    %1140 = vst.msk [vmem:[#allocation3 + $0x68] sm:$0xff] %vm334, %v1124
    %1141 = vst.msk [vmem:[#allocation3 + $0x70] sm:$0xff] %vm334, %v1125
    %1142 = vst.msk [vmem:[#allocation3 + $0x78] sm:$0xff] %vm334, %v1126
    %1143 = vst.msk [vmem:[#allocation2] sm:$0xff] %vm334, %v855
    %1144 = vst.msk [vmem:[#allocation2 + $0x8] sm:$0xff] %vm334, %v856
    %1145 = vst.msk [vmem:[#allocation2 + $0x10] sm:$0xff] %vm334, %v857
    %1146 = vst.msk [vmem:[#allocation2 + $0x18] sm:$0xff] %vm334, %v858
    %1147 = vst.msk [vmem:[#allocation2 + $0x20] sm:$0xff] %vm334, %v859
    %1148 = vst.msk [vmem:[#allocation2 + $0x28] sm:$0xff] %vm334, %v860
    %1149 = vst.msk [vmem:[#allocation2 + $0x30] sm:$0xff] %vm334, %v861
    %1150 = vst.msk [vmem:[#allocation2 + $0x38] sm:$0xff] %vm334, %v862
    %1151 = vst.msk [vmem:[#allocation2 + $0x40] sm:$0xff] %vm334, %v863
    %1152 = vst.msk [vmem:[#allocation2 + $0x48] sm:$0xff] %vm334, %v864
    %1153 = vst.msk [vmem:[#allocation2 + $0x50] sm:$0xff] %vm334, %v865
    %1154 = vst.msk [vmem:[#allocation2 + $0x58] sm:$0xff] %vm334, %v866
    %1155 = vst.msk [vmem:[#allocation2 + $0x60] sm:$0xff] %vm334, %v867
    %1156 = vst.msk [vmem:[#allocation2 + $0x68] sm:$0xff] %vm334, %v868
    %1157 = vst.msk [vmem:[#allocation2 + $0x70] sm:$0xff] %vm334, %v869
    %1158 = vst.msk [vmem:[#allocation2 + $0x78] sm:$0xff] %vm334, %v870
  $region33: #{tpu_custom_call.1} parent=0 // pred_fallthru
    _
  // Predicated region
  $region34: #{tpu_custom_call.1} parent=0 // pred_check
    %p1159 = pneg %p20
  $region35: #{tpu_custom_call.1} parent=0 // pred_check_branch
    %1161 = sbr.rel (%p1159) target = $region37
  $region36: #{tpu_custom_call.1} parent=0 // pred_region
    %v1162 = vld [vmem:[%s4] sm:$0xff]
    %v1163 = vld [vmem:[%s4 + $0x8] sm:$0xff]
    %v1164 = vld [vmem:[%s4 + $0x10] sm:$0xff]
    %v1165 = vld [vmem:[%s4 + $0x18] sm:$0xff]
    %v1166 = vld [vmem:[%s4 + $0x20] sm:$0xff]
    %v1167 = vld [vmem:[%s4 + $0x28] sm:$0xff]
    %v1168 = vld [vmem:[%s4 + $0x30] sm:$0xff]
    %v1169 = vld [vmem:[%s4 + $0x38] sm:$0xff]
    %v1170 = vld [vmem:[%s4 + $0x40] sm:$0xff]
    %v1171 = vld [vmem:[%s4 + $0x48] sm:$0xff]
    %v1172 = vld [vmem:[%s4 + $0x50] sm:$0xff]
    %v1173 = vld [vmem:[%s4 + $0x58] sm:$0xff]
    %v1174 = vld [vmem:[%s4 + $0x60] sm:$0xff]
    %v1175 = vld [vmem:[%s4 + $0x68] sm:$0xff]
    %v1176 = vld [vmem:[%s4 + $0x70] sm:$0xff]
    %v1177 = vld [vmem:[%s4 + $0x78] sm:$0xff]
    %v1178 = vld [vmem:[#allocation4] sm:$0xff]
    %v1179 = vld [vmem:[#allocation4 + $0x8] sm:$0xff]
    %v1180 = vld [vmem:[#allocation4 + $0x10] sm:$0xff]
    %v1181 = vld [vmem:[#allocation4 + $0x18] sm:$0xff]
    %v1182 = vld [vmem:[#allocation4 + $0x20] sm:$0xff]
    %v1183 = vld [vmem:[#allocation4 + $0x28] sm:$0xff]
    %v1184 = vld [vmem:[#allocation4 + $0x30] sm:$0xff]
    %v1185 = vld [vmem:[#allocation4 + $0x38] sm:$0xff]
    %v1186 = vld [vmem:[#allocation4 + $0x40] sm:$0xff]
    %v1187 = vld [vmem:[#allocation4 + $0x48] sm:$0xff]
    %v1188 = vld [vmem:[#allocation4 + $0x50] sm:$0xff]
    %v1189 = vld [vmem:[#allocation4 + $0x58] sm:$0xff]
    %v1190 = vld [vmem:[#allocation4 + $0x60] sm:$0xff]
    %v1191 = vld [vmem:[#allocation4 + $0x68] sm:$0xff]
    %v1192 = vld [vmem:[#allocation4 + $0x70] sm:$0xff]
    %v1193 = vld [vmem:[#allocation4 + $0x78] sm:$0xff]
    %1210 = vrot.lane.b32.xlu0 %v1162, 127
    %v1211 = vpop.permute.xlu0 %1210
    %1212 = vrot.lane.b32.xlu0 %v1163, 127
    %v1213 = vpop.permute.xlu0 %1212
    %1214 = vrot.lane.b32.xlu0 %v1164, 127
    %v1215 = vpop.permute.xlu0 %1214
    %1216 = vrot.lane.b32.xlu0 %v1165, 127
    %v1217 = vpop.permute.xlu0 %1216
    %1218 = vrot.lane.b32.xlu0 %v1166, 127
    %v1219 = vpop.permute.xlu0 %1218
    %1220 = vrot.lane.b32.xlu0 %v1167, 127
    %v1221 = vpop.permute.xlu0 %1220
    %1222 = vrot.lane.b32.xlu0 %v1168, 127
    %v1223 = vpop.permute.xlu0 %1222
    %1224 = vrot.lane.b32.xlu0 %v1169, 127
    %v1225 = vpop.permute.xlu0 %1224
    %1226 = vrot.lane.b32.xlu0 %v1170, 127
    %v1227 = vpop.permute.xlu0 %1226
    %1228 = vrot.lane.b32.xlu0 %v1171, 127
    %v1229 = vpop.permute.xlu0 %1228
    %1230 = vrot.lane.b32.xlu0 %v1172, 127
    %v1231 = vpop.permute.xlu0 %1230
    %1232 = vrot.lane.b32.xlu0 %v1173, 127
    %v1233 = vpop.permute.xlu0 %1232
    %1234 = vrot.lane.b32.xlu0 %v1174, 127
    %v1235 = vpop.permute.xlu0 %1234
    %1236 = vrot.lane.b32.xlu0 %v1175, 127
    %v1237 = vpop.permute.xlu0 %1236
    %1238 = vrot.lane.b32.xlu0 %v1176, 127
    %v1239 = vpop.permute.xlu0 %1238
    %1240 = vrot.lane.b32.xlu0 %v1177, 127
    %v1241 = vpop.permute.xlu0 %1240
    %v1258 = vsub.f32 %v1178, %v1211
    %v1259 = vsub.f32 %v1179, %v1213
    %v1260 = vsub.f32 %v1180, %v1215
    %v1261 = vsub.f32 %v1181, %v1217
    %v1262 = vsub.f32 %v1182, %v1219
    %v1263 = vsub.f32 %v1183, %v1221
    %v1264 = vsub.f32 %v1184, %v1223
    %v1265 = vsub.f32 %v1185, %v1225
    %v1266 = vsub.f32 %v1186, %v1227
    %v1267 = vsub.f32 %v1187, %v1229
    %v1268 = vsub.f32 %v1188, %v1231
    %v1269 = vsub.f32 %v1189, %v1233
    %v1270 = vsub.f32 %v1190, %v1235
    %v1271 = vsub.f32 %v1191, %v1237
    %v1272 = vsub.f32 %v1192, %v1239
    %v1273 = vsub.f32 %v1193, %v1241
    %v1274 = vld [vmem:[#allocation2] sm:$0xff]
    %v1275 = vld [vmem:[#allocation2 + $0x8] sm:$0xff]
    %v1276 = vld [vmem:[#allocation2 + $0x10] sm:$0xff]
    %v1277 = vld [vmem:[#allocation2 + $0x18] sm:$0xff]
    %v1278 = vld [vmem:[#allocation2 + $0x20] sm:$0xff]
    %v1279 = vld [vmem:[#allocation2 + $0x28] sm:$0xff]
    %v1280 = vld [vmem:[#allocation2 + $0x30] sm:$0xff]
    %v1281 = vld [vmem:[#allocation2 + $0x38] sm:$0xff]
    %v1282 = vld [vmem:[#allocation2 + $0x40] sm:$0xff]
    %v1283 = vld [vmem:[#allocation2 + $0x48] sm:$0xff]
    %v1284 = vld [vmem:[#allocation2 + $0x50] sm:$0xff]
    %v1285 = vld [vmem:[#allocation2 + $0x58] sm:$0xff]
    %v1286 = vld [vmem:[#allocation2 + $0x60] sm:$0xff]
    %v1287 = vld [vmem:[#allocation2 + $0x68] sm:$0xff]
    %v1288 = vld [vmem:[#allocation2 + $0x70] sm:$0xff]
    %v1289 = vld [vmem:[#allocation2 + $0x78] sm:$0xff]
    %v1290 = vld [vmem:[#allocation3] sm:$0xff]
    %v1291 = vld [vmem:[#allocation3 + $0x8] sm:$0xff]
    %v1292 = vld [vmem:[#allocation3 + $0x10] sm:$0xff]
    %v1293 = vld [vmem:[#allocation3 + $0x18] sm:$0xff]
    %v1294 = vld [vmem:[#allocation3 + $0x20] sm:$0xff]
    %v1295 = vld [vmem:[#allocation3 + $0x28] sm:$0xff]
    %v1296 = vld [vmem:[#allocation3 + $0x30] sm:$0xff]
    %v1297 = vld [vmem:[#allocation3 + $0x38] sm:$0xff]
    %v1298 = vld [vmem:[#allocation3 + $0x40] sm:$0xff]
    %v1299 = vld [vmem:[#allocation3 + $0x48] sm:$0xff]
    %v1300 = vld [vmem:[#allocation3 + $0x50] sm:$0xff]
    %v1301 = vld [vmem:[#allocation3 + $0x58] sm:$0xff]
    %v1302 = vld [vmem:[#allocation3 + $0x60] sm:$0xff]
    %v1303 = vld [vmem:[#allocation3 + $0x68] sm:$0xff]
    %v1304 = vld [vmem:[#allocation3 + $0x70] sm:$0xff]
    %v1305 = vld [vmem:[#allocation3 + $0x78] sm:$0xff]
    %v1306 = vlog2.pop %v1290
    %v1307 = vmul.f32 %v1306, 0.6931472
    %v1308 = vlog2.pop %v1291
    %v1309 = vmul.f32 %v1308, 0.6931472
    %v1310 = vlog2.pop %v1292
    %v1311 = vmul.f32 %v1310, 0.6931472
    %v1312 = vlog2.pop %v1293
    %v1313 = vmul.f32 %v1312, 0.6931472
    %v1314 = vlog2.pop %v1294
    %v1315 = vmul.f32 %v1314, 0.6931472
    %v1316 = vlog2.pop %v1295
    %v1317 = vmul.f32 %v1316, 0.6931472
    %v1318 = vlog2.pop %v1296
    %v1319 = vmul.f32 %v1318, 0.6931472
    %v1320 = vlog2.pop %v1297
    %v1321 = vmul.f32 %v1320, 0.6931472
    %v1322 = vlog2.pop %v1298
    %v1323 = vmul.f32 %v1322, 0.6931472
    %v1324 = vlog2.pop %v1299
    %v1325 = vmul.f32 %v1324, 0.6931472
    %v1326 = vlog2.pop %v1300
    %v1327 = vmul.f32 %v1326, 0.6931472
    %v1328 = vlog2.pop %v1301
    %v1329 = vmul.f32 %v1328, 0.6931472
    %v1330 = vlog2.pop %v1302
    %v1331 = vmul.f32 %v1330, 0.6931472
    %v1332 = vlog2.pop %v1303
    %v1333 = vmul.f32 %v1332, 0.6931472
    %v1334 = vlog2.pop %v1304
    %v1335 = vmul.f32 %v1334, 0.6931472
    %v1336 = vlog2.pop %v1305
    %v1337 = vmul.f32 %v1336, 0.6931472
    %v1338 = vadd.f32 %v1274, %v1307
    %v1339 = vadd.f32 %v1275, %v1309
    %v1340 = vadd.f32 %v1276, %v1311
    %v1341 = vadd.f32 %v1277, %v1313
    %v1342 = vadd.f32 %v1278, %v1315
    %v1343 = vadd.f32 %v1279, %v1317
    %v1344 = vadd.f32 %v1280, %v1319
    %v1345 = vadd.f32 %v1281, %v1321
    %v1346 = vadd.f32 %v1282, %v1323
    %v1347 = vadd.f32 %v1283, %v1325
    %v1348 = vadd.f32 %v1284, %v1327
    %v1349 = vadd.f32 %v1285, %v1329
    %v1350 = vadd.f32 %v1286, %v1331
    %v1351 = vadd.f32 %v1287, %v1333
    %v1352 = vadd.f32 %v1288, %v1335
    %v1353 = vadd.f32 %v1289, %v1337
    %v1354 = vmul.f32 %v1162, %v1338
    %v1355 = vmul.f32 %v1163, %v1339
    %v1356 = vmul.f32 %v1164, %v1340
    %v1357 = vmul.f32 %v1165, %v1341
    %v1358 = vmul.f32 %v1166, %v1342
    %v1359 = vmul.f32 %v1167, %v1343
    %v1360 = vmul.f32 %v1168, %v1344
    %v1361 = vmul.f32 %v1169, %v1345
    %v1362 = vmul.f32 %v1170, %v1346
    %v1363 = vmul.f32 %v1171, %v1347
    %v1364 = vmul.f32 %v1172, %v1348
    %v1365 = vmul.f32 %v1173, %v1349
    %v1366 = vmul.f32 %v1174, %v1350
    %v1367 = vmul.f32 %v1175, %v1351
    %v1368 = vmul.f32 %v1176, %v1352
    %v1369 = vmul.f32 %v1177, %v1353
    %v1370 = vsub.f32 %v1258, %v1354
    %v1371 = vsub.f32 %v1259, %v1355
    %v1372 = vsub.f32 %v1260, %v1356
    %v1373 = vsub.f32 %v1261, %v1357
    %v1374 = vsub.f32 %v1262, %v1358
    %v1375 = vsub.f32 %v1263, %v1359
    %v1376 = vsub.f32 %v1264, %v1360
    %v1377 = vsub.f32 %v1265, %v1361
    %v1378 = vsub.f32 %v1266, %v1362
    %v1379 = vsub.f32 %v1267, %v1363
    %v1380 = vsub.f32 %v1268, %v1364
    %v1381 = vsub.f32 %v1269, %v1365
    %v1382 = vsub.f32 %v1270, %v1366
    %v1383 = vsub.f32 %v1271, %v1367
    %v1384 = vsub.f32 %v1272, %v1368
    %v1385 = vsub.f32 %v1273, %v1369
    %v1386 = vmax.f32 %v1162, 1.0
    %v1387 = vmax.f32 %v1163, 1.0
    %v1388 = vmax.f32 %v1164, 1.0
    %v1389 = vmax.f32 %v1165, 1.0
    %v1390 = vmax.f32 %v1166, 1.0
    %v1391 = vmax.f32 %v1167, 1.0
    %v1392 = vmax.f32 %v1168, 1.0
    %v1393 = vmax.f32 %v1169, 1.0
    %v1394 = vmax.f32 %v1170, 1.0
    %v1395 = vmax.f32 %v1171, 1.0
    %v1396 = vmax.f32 %v1172, 1.0
    %v1397 = vmax.f32 %v1173, 1.0
    %v1398 = vmax.f32 %v1174, 1.0
    %v1399 = vmax.f32 %v1175, 1.0
    %v1400 = vmax.f32 %v1176, 1.0
    %v1401 = vmax.f32 %v1177, 1.0
    %v1402 = vrcp.pop %v1386
    %v1403 = vmul.f32 %v1386, %v1402
    %v1404 = vsub.f32 1.0, %v1403
    %v1405 = vmul.f32 %v1402, %v1404
    %v1406 = vadd.f32 %v1402, %v1405
    %vm1407 = vweird.f32 %v1386
    %vm1408 = vweird.f32 %v1402
    %vm1409 = vmor %vm1407, %vm1408
    %v1410 = vsel %vm1409, %v1402, %v1406
    %v1411 = vand.u32 2147483647, %v1386
    %vm1412 = vcmp.eq.f32.partialorder %v1411, 8.507059e+37
    %v1413 = vand.u32 %v1386, 2147483648
    %v1414 = vor.u32 1.1754944e-38, %v1413
    %v1415 = vsel %vm1412, %v1414, %v1410
    %v1416 = vmul.f32 %v1370, %v1415
    %v1417 = vrcp.pop %v1387
    %v1418 = vmul.f32 %v1387, %v1417
    %v1419 = vsub.f32 1.0, %v1418
    %v1420 = vmul.f32 %v1417, %v1419
    %v1421 = vadd.f32 %v1417, %v1420
    %vm1422 = vweird.f32 %v1387
    %vm1423 = vweird.f32 %v1417
    %vm1424 = vmor %vm1422, %vm1423
    %v1425 = vsel %vm1424, %v1417, %v1421
    %v1426 = vand.u32 2147483647, %v1387
    %vm1427 = vcmp.eq.f32.partialorder %v1426, 8.507059e+37
    %v1428 = vand.u32 %v1387, 2147483648
    %v1429 = vor.u32 1.1754944e-38, %v1428
    %v1430 = vsel %vm1427, %v1429, %v1425
    %v1431 = vmul.f32 %v1371, %v1430
    %v1432 = vrcp.pop %v1388
    %v1433 = vmul.f32 %v1388, %v1432
    %v1434 = vsub.f32 1.0, %v1433
    %v1435 = vmul.f32 %v1432, %v1434
    %v1436 = vadd.f32 %v1432, %v1435
    %vm1437 = vweird.f32 %v1388
    %vm1438 = vweird.f32 %v1432
    %vm1439 = vmor %vm1437, %vm1438
    %v1440 = vsel %vm1439, %v1432, %v1436
    %v1441 = vand.u32 2147483647, %v1388
    %vm1442 = vcmp.eq.f32.partialorder %v1441, 8.507059e+37
    %v1443 = vand.u32 %v1388, 2147483648
    %v1444 = vor.u32 1.1754944e-38, %v1443
    %v1445 = vsel %vm1442, %v1444, %v1440
    %v1446 = vmul.f32 %v1372, %v1445
    %v1447 = vrcp.pop %v1389
    %v1448 = vmul.f32 %v1389, %v1447
    %v1449 = vsub.f32 1.0, %v1448
    %v1450 = vmul.f32 %v1447, %v1449
    %v1451 = vadd.f32 %v1447, %v1450
    %vm1452 = vweird.f32 %v1389
    %vm1453 = vweird.f32 %v1447
    %vm1454 = vmor %vm1452, %vm1453
    %v1455 = vsel %vm1454, %v1447, %v1451
    %v1456 = vand.u32 2147483647, %v1389
    %vm1457 = vcmp.eq.f32.partialorder %v1456, 8.507059e+37
    %v1458 = vand.u32 %v1389, 2147483648
    %v1459 = vor.u32 1.1754944e-38, %v1458
    %v1460 = vsel %vm1457, %v1459, %v1455
    %v1461 = vmul.f32 %v1373, %v1460
    %v1462 = vrcp.pop %v1390
    %v1463 = vmul.f32 %v1390, %v1462
    %v1464 = vsub.f32 1.0, %v1463
    %v1465 = vmul.f32 %v1462, %v1464
    %v1466 = vadd.f32 %v1462, %v1465
    %vm1467 = vweird.f32 %v1390
    %vm1468 = vweird.f32 %v1462
    %vm1469 = vmor %vm1467, %vm1468
    %v1470 = vsel %vm1469, %v1462, %v1466
    %v1471 = vand.u32 2147483647, %v1390
    %vm1472 = vcmp.eq.f32.partialorder %v1471, 8.507059e+37
    %v1473 = vand.u32 %v1390, 2147483648
    %v1474 = vor.u32 1.1754944e-38, %v1473
    %v1475 = vsel %vm1472, %v1474, %v1470
    %v1476 = vmul.f32 %v1374, %v1475
    %v1477 = vrcp.pop %v1391
    %v1478 = vmul.f32 %v1391, %v1477
    %v1479 = vsub.f32 1.0, %v1478
    %v1480 = vmul.f32 %v1477, %v1479
    %v1481 = vadd.f32 %v1477, %v1480
    %vm1482 = vweird.f32 %v1391
    %vm1483 = vweird.f32 %v1477
    %vm1484 = vmor %vm1482, %vm1483
    %v1485 = vsel %vm1484, %v1477, %v1481
    %v1486 = vand.u32 2147483647, %v1391
    %vm1487 = vcmp.eq.f32.partialorder %v1486, 8.507059e+37
    %v1488 = vand.u32 %v1391, 2147483648
    %v1489 = vor.u32 1.1754944e-38, %v1488
    %v1490 = vsel %vm1487, %v1489, %v1485
    %v1491 = vmul.f32 %v1375, %v1490
    %v1492 = vrcp.pop %v1392
    %v1493 = vmul.f32 %v1392, %v1492
    %v1494 = vsub.f32 1.0, %v1493
    %v1495 = vmul.f32 %v1492, %v1494
    %v1496 = vadd.f32 %v1492, %v1495
    %vm1497 = vweird.f32 %v1392
    %vm1498 = vweird.f32 %v1492
    %vm1499 = vmor %vm1497, %vm1498
    %v1500 = vsel %vm1499, %v1492, %v1496
    %v1501 = vand.u32 2147483647, %v1392
    %vm1502 = vcmp.eq.f32.partialorder %v1501, 8.507059e+37
    %v1503 = vand.u32 %v1392, 2147483648
    %v1504 = vor.u32 1.1754944e-38, %v1503
    %v1505 = vsel %vm1502, %v1504, %v1500
    %v1506 = vmul.f32 %v1376, %v1505
    %v1507 = vrcp.pop %v1393
    %v1508 = vmul.f32 %v1393, %v1507
    %v1509 = vsub.f32 1.0, %v1508
    %v1510 = vmul.f32 %v1507, %v1509
    %v1511 = vadd.f32 %v1507, %v1510
    %vm1512 = vweird.f32 %v1393
    %vm1513 = vweird.f32 %v1507
    %vm1514 = vmor %vm1512, %vm1513
    %v1515 = vsel %vm1514, %v1507, %v1511
    %v1516 = vand.u32 2147483647, %v1393
    %vm1517 = vcmp.eq.f32.partialorder %v1516, 8.507059e+37
    %v1518 = vand.u32 %v1393, 2147483648
    %v1519 = vor.u32 1.1754944e-38, %v1518
    %v1520 = vsel %vm1517, %v1519, %v1515
    %v1521 = vmul.f32 %v1377, %v1520
    %v1522 = vrcp.pop %v1394
    %v1523 = vmul.f32 %v1394, %v1522
    %v1524 = vsub.f32 1.0, %v1523
    %v1525 = vmul.f32 %v1522, %v1524
    %v1526 = vadd.f32 %v1522, %v1525
    %vm1527 = vweird.f32 %v1394
    %vm1528 = vweird.f32 %v1522
    %vm1529 = vmor %vm1527, %vm1528
    %v1530 = vsel %vm1529, %v1522, %v1526
    %v1531 = vand.u32 2147483647, %v1394
    %vm1532 = vcmp.eq.f32.partialorder %v1531, 8.507059e+37
    %v1533 = vand.u32 %v1394, 2147483648
    %v1534 = vor.u32 1.1754944e-38, %v1533
    %v1535 = vsel %vm1532, %v1534, %v1530
    %v1536 = vmul.f32 %v1378, %v1535
    %v1537 = vrcp.pop %v1395
    %v1538 = vmul.f32 %v1395, %v1537
    %v1539 = vsub.f32 1.0, %v1538
    %v1540 = vmul.f32 %v1537, %v1539
    %v1541 = vadd.f32 %v1537, %v1540
    %vm1542 = vweird.f32 %v1395
    %vm1543 = vweird.f32 %v1537
    %vm1544 = vmor %vm1542, %vm1543
    %v1545 = vsel %vm1544, %v1537, %v1541
    %v1546 = vand.u32 2147483647, %v1395
    %vm1547 = vcmp.eq.f32.partialorder %v1546, 8.507059e+37
    %v1548 = vand.u32 %v1395, 2147483648
    %v1549 = vor.u32 1.1754944e-38, %v1548
    %v1550 = vsel %vm1547, %v1549, %v1545
    %v1551 = vmul.f32 %v1379, %v1550
    %v1552 = vrcp.pop %v1396
    %v1553 = vmul.f32 %v1396, %v1552
    %v1554 = vsub.f32 1.0, %v1553
    %v1555 = vmul.f32 %v1552, %v1554
    %v1556 = vadd.f32 %v1552, %v1555
    %vm1557 = vweird.f32 %v1396
    %vm1558 = vweird.f32 %v1552
    %vm1559 = vmor %vm1557, %vm1558
    %v1560 = vsel %vm1559, %v1552, %v1556
    %v1561 = vand.u32 2147483647, %v1396
    %vm1562 = vcmp.eq.f32.partialorder %v1561, 8.507059e+37
    %v1563 = vand.u32 %v1396, 2147483648
    %v1564 = vor.u32 1.1754944e-38, %v1563
    %v1565 = vsel %vm1562, %v1564, %v1560
    %v1566 = vmul.f32 %v1380, %v1565
    %v1567 = vrcp.pop %v1397
    %v1568 = vmul.f32 %v1397, %v1567
    %v1569 = vsub.f32 1.0, %v1568
    %v1570 = vmul.f32 %v1567, %v1569
    %v1571 = vadd.f32 %v1567, %v1570
    %vm1572 = vweird.f32 %v1397
    %vm1573 = vweird.f32 %v1567
    %vm1574 = vmor %vm1572, %vm1573
    %v1575 = vsel %vm1574, %v1567, %v1571
    %v1576 = vand.u32 2147483647, %v1397
    %vm1577 = vcmp.eq.f32.partialorder %v1576, 8.507059e+37
    %v1578 = vand.u32 %v1397, 2147483648
    %v1579 = vor.u32 1.1754944e-38, %v1578
    %v1580 = vsel %vm1577, %v1579, %v1575
    %v1581 = vmul.f32 %v1381, %v1580
    %v1582 = vrcp.pop %v1398
    %v1583 = vmul.f32 %v1398, %v1582
    %v1584 = vsub.f32 1.0, %v1583
    %v1585 = vmul.f32 %v1582, %v1584
    %v1586 = vadd.f32 %v1582, %v1585
    %vm1587 = vweird.f32 %v1398
    %vm1588 = vweird.f32 %v1582
    %vm1589 = vmor %vm1587, %vm1588
    %v1590 = vsel %vm1589, %v1582, %v1586
    %v1591 = vand.u32 2147483647, %v1398
    %vm1592 = vcmp.eq.f32.partialorder %v1591, 8.507059e+37
    %v1593 = vand.u32 %v1398, 2147483648
    %v1594 = vor.u32 1.1754944e-38, %v1593
    %v1595 = vsel %vm1592, %v1594, %v1590
    %v1596 = vmul.f32 %v1382, %v1595
    %v1597 = vrcp.pop %v1399
    %v1598 = vmul.f32 %v1399, %v1597
    %v1599 = vsub.f32 1.0, %v1598
    %v1600 = vmul.f32 %v1597, %v1599
    %v1601 = vadd.f32 %v1597, %v1600
    %vm1602 = vweird.f32 %v1399
    %vm1603 = vweird.f32 %v1597
    %vm1604 = vmor %vm1602, %vm1603
    %v1605 = vsel %vm1604, %v1597, %v1601
    %v1606 = vand.u32 2147483647, %v1399
    %vm1607 = vcmp.eq.f32.partialorder %v1606, 8.507059e+37
    %v1608 = vand.u32 %v1399, 2147483648
    %v1609 = vor.u32 1.1754944e-38, %v1608
    %v1610 = vsel %vm1607, %v1609, %v1605
    %v1611 = vmul.f32 %v1383, %v1610
    %v1612 = vrcp.pop %v1400
    %v1613 = vmul.f32 %v1400, %v1612
    %v1614 = vsub.f32 1.0, %v1613
    %v1615 = vmul.f32 %v1612, %v1614
    %v1616 = vadd.f32 %v1612, %v1615
    %vm1617 = vweird.f32 %v1400
    %vm1618 = vweird.f32 %v1612
    %vm1619 = vmor %vm1617, %vm1618
    %v1620 = vsel %vm1619, %v1612, %v1616
    %v1621 = vand.u32 2147483647, %v1400
    %vm1622 = vcmp.eq.f32.partialorder %v1621, 8.507059e+37
    %v1623 = vand.u32 %v1400, 2147483648
    %v1624 = vor.u32 1.1754944e-38, %v1623
    %v1625 = vsel %vm1622, %v1624, %v1620
    %v1626 = vmul.f32 %v1384, %v1625
    %v1627 = vrcp.pop %v1401
    %v1628 = vmul.f32 %v1401, %v1627
    %v1629 = vsub.f32 1.0, %v1628
    %v1630 = vmul.f32 %v1627, %v1629
    %v1631 = vadd.f32 %v1627, %v1630
    %vm1632 = vweird.f32 %v1401
    %vm1633 = vweird.f32 %v1627
    %vm1634 = vmor %vm1632, %vm1633
    %v1635 = vsel %vm1634, %v1627, %v1631
    %v1636 = vand.u32 2147483647, %v1401
    %vm1637 = vcmp.eq.f32.partialorder %v1636, 8.507059e+37
    %v1638 = vand.u32 %v1401, 2147483648
    %v1639 = vor.u32 1.1754944e-38, %v1638
    %v1640 = vsel %vm1637, %v1639, %v1635
    %v1641 = vmul.f32 %v1385, %v1640
    %v1642 = vmul.f32 %v1416, -1.0
    %v1643 = vmul.f32 %v1431, -1.0
    %v1644 = vmul.f32 %v1446, -1.0
    %v1645 = vmul.f32 %v1461, -1.0
    %v1646 = vmul.f32 %v1476, -1.0
    %v1647 = vmul.f32 %v1491, -1.0
    %v1648 = vmul.f32 %v1506, -1.0
    %v1649 = vmul.f32 %v1521, -1.0
    %v1650 = vmul.f32 %v1536, -1.0
    %v1651 = vmul.f32 %v1551, -1.0
    %v1652 = vmul.f32 %v1566, -1.0
    %v1653 = vmul.f32 %v1581, -1.0
    %v1654 = vmul.f32 %v1596, -1.0
    %v1655 = vmul.f32 %v1611, -1.0
    %v1656 = vmul.f32 %v1626, -1.0
    %v1657 = vmul.f32 %v1641, -1.0
    %vm1658 = vcmp.gt.f32.partialorder %v1162, 0.0
    %vm1659 = vcmp.gt.f32.partialorder %v1163, 0.0
    %vm1660 = vcmp.gt.f32.partialorder %v1164, 0.0
    %vm1661 = vcmp.gt.f32.partialorder %v1165, 0.0
    %vm1662 = vcmp.gt.f32.partialorder %v1166, 0.0
    %vm1663 = vcmp.gt.f32.partialorder %v1167, 0.0
    %vm1664 = vcmp.gt.f32.partialorder %v1168, 0.0
    %vm1665 = vcmp.gt.f32.partialorder %v1169, 0.0
    %vm1666 = vcmp.gt.f32.partialorder %v1170, 0.0
    %vm1667 = vcmp.gt.f32.partialorder %v1171, 0.0
    %vm1668 = vcmp.gt.f32.partialorder %v1172, 0.0
    %vm1669 = vcmp.gt.f32.partialorder %v1173, 0.0
    %vm1670 = vcmp.gt.f32.partialorder %v1174, 0.0
    %vm1671 = vcmp.gt.f32.partialorder %v1175, 0.0
    %vm1672 = vcmp.gt.f32.partialorder %v1176, 0.0
    %vm1673 = vcmp.gt.f32.partialorder %v1177, 0.0
    %v1674 = vsel %vm1658, %v1642, 0.0
    %v1675 = vsel %vm1659, %v1643, 0.0
    %v1676 = vsel %vm1660, %v1644, 0.0
    %v1677 = vsel %vm1661, %v1645, 0.0
    %v1678 = vsel %vm1662, %v1646, 0.0
    %v1679 = vsel %vm1663, %v1647, 0.0
    %v1680 = vsel %vm1664, %v1648, 0.0
    %v1681 = vsel %vm1665, %v1649, 0.0
    %v1682 = vsel %vm1666, %v1650, 0.0
    %v1683 = vsel %vm1667, %v1651, 0.0
    %v1684 = vsel %vm1668, %v1652, 0.0
    %v1685 = vsel %vm1669, %v1653, 0.0
    %v1686 = vsel %vm1670, %v1654, 0.0
    %v1687 = vsel %vm1671, %v1655, 0.0
    %v1688 = vsel %vm1672, %v1656, 0.0
    %v1689 = vsel %vm1673, %v1657, 0.0
    %1690 = vst.msk [vmem:[%s5] sm:$0xff] %vm334, %v1674
    %1691 = vst.msk [vmem:[%s5 + $0x8] sm:$0xff] %vm334, %v1675
    %1692 = vst.msk [vmem:[%s5 + $0x10] sm:$0xff] %vm334, %v1676
    %1693 = vst.msk [vmem:[%s5 + $0x18] sm:$0xff] %vm334, %v1677
    %1694 = vst.msk [vmem:[%s5 + $0x20] sm:$0xff] %vm334, %v1678
    %1695 = vst.msk [vmem:[%s5 + $0x28] sm:$0xff] %vm334, %v1679
    %1696 = vst.msk [vmem:[%s5 + $0x30] sm:$0xff] %vm334, %v1680
    %1697 = vst.msk [vmem:[%s5 + $0x38] sm:$0xff] %vm334, %v1681
    %1698 = vst.msk [vmem:[%s5 + $0x40] sm:$0xff] %vm334, %v1682
    %1699 = vst.msk [vmem:[%s5 + $0x48] sm:$0xff] %vm334, %v1683
    %1700 = vst.msk [vmem:[%s5 + $0x50] sm:$0xff] %vm334, %v1684
    %1701 = vst.msk [vmem:[%s5 + $0x58] sm:$0xff] %vm334, %v1685
    %1702 = vst.msk [vmem:[%s5 + $0x60] sm:$0xff] %vm334, %v1686
    %1703 = vst.msk [vmem:[%s5 + $0x68] sm:$0xff] %vm334, %v1687
    %1704 = vst.msk [vmem:[%s5 + $0x70] sm:$0xff] %vm334, %v1688
    %1705 = vst.msk [vmem:[%s5 + $0x78] sm:$0xff] %vm334, %v1689
  $region37: #{tpu_custom_call.1} parent=0 // pred_fallthru
    _
  // Predicated region
  $region38: #{tpu_custom_call.1} parent=0 // pred_check
    _
  $region39: #{tpu_custom_call.1} parent=0 // pred_check_branch
    %1707 = sbr.rel (0) target = $region41
  $region40: #{tpu_custom_call.1} parent=0 // pred_region
    _
  $region41: #{tpu_custom_call.1} parent=0 // pred_fallthru
    _
  // Predicated region
  $region42: #{tpu_custom_call.1} parent=0 // pred_check
    _
  $region43: #{tpu_custom_call.1} parent=0 // pred_check_branch
    %1709 = sbr.rel (0) target = $region45
  $region44: #{tpu_custom_call.1} parent=0 // pred_region
    _
  $region45: #{tpu_custom_call.1} parent=0 // pred_fallthru
    _

</llo_original>
